<compile_context>
chip_gen: v6e
topology: v6e:2x2x1
jax: 0.10.0
libtpu: 0.0.40
codegen_flags: <defaults>
</compile_context>

<pallas_src>
import jax
import jax.numpy as jnp
from jax.experimental import pallas as pl
from jax.experimental.pallas import tpu as pltpu

IN_DIM = 28 * 28     # 784
HID_DIM = 512
OUT_DIM = 10
OUT_PAD = 128        # lane-dense padded output width


def _round_up(n, m):
    return ((n + m - 1) // m) * m


def mlp_kernel(x_ref, w1_ref, b1_ref, w2_ref, b2_ref, o_ref):
    # x_ref:  (TB, 784)  bf16      w1_ref: (784, 512) bf16   b1_ref: (1, 512) f32
    # w2_ref: (512, 128) f32       b2_ref: (1, 128)   f32    o_ref:  (TB, 128) f32
    x = x_ref[...]
    # fc1 + ReLU (bf16 MXU matmul, f32 accumulation)
    h = jnp.dot(x, w1_ref[...], preferred_element_type=jnp.float32) + b1_ref[...]
    h = jnp.maximum(h, 0.0)
    # fc2 (padded to 128 output lanes; extra columns are zeros)
    y = jnp.dot(h, w2_ref[...], preferred_element_type=jnp.float32) + b2_ref[...]
    o_ref[...] = y.astype(o_ref.dtype)


def net_forward(x_nchw, w1, b1, w2, b2):
    """Forward pass of Net: flatten -> fc1 -> relu -> fc2.

    x_nchw: (B, 1, 28, 28) float32
    w1: (784, 512), b1: (512,), w2: (512, 10), b2: (10,)
    returns: (B, 10) float32
    """
    B = x_nchw.shape[0]
    x = x_nchw.reshape(B, IN_DIM)            # same semantics as x.view(-1, 784)

    # Batch tile: 256 rows per grid step (multiple of 8 sublanes); small batches
    # use a single full-batch tile rounded up to a multiple of 8.
    TB = 256 if B >= 256 else _round_up(B, 8)
    B_pad = _round_up(B, TB)
    if B_pad != B:
        x = jnp.pad(x, ((0, B_pad - B), (0, 0)))

    # bf16 for the bandwidth-dominant operands; f32 accumulation in-kernel.
    x_bf = x.astype(jnp.bfloat16)
    w1_bf = w1.astype(jnp.bfloat16)
    b1_2d = b1.reshape(1, -1).astype(jnp.float32)

    # Pad fc2 to a lane-dense 128-wide output (zero columns -> zero logits,
    # sliced away below). W2 stays f32 (negligible size).
    w2_pad = jnp.zeros((HID_DIM, OUT_PAD), jnp.float32).at[:, :OUT_DIM].set(w2)
    b2_pad = jnp.zeros((1, OUT_PAD), jnp.float32).at[:, :OUT_DIM].set(b2)

    grid = (B_pad // TB,)

    cost = pl.CostEstimate(
        flops=2 * B_pad * (IN_DIM * HID_DIM + HID_DIM * OUT_PAD),
        transcendentals=0,
        bytes_accessed=(x_bf.size * 2 + w1_bf.size * 2
                        + w2_pad.size * 4 + B_pad * OUT_PAD * 4),
    )

    out_pad = pl.pallas_call(
        mlp_kernel,
        out_shape=jax.ShapeDtypeStruct((B_pad, OUT_PAD), jnp.float32),
        grid_spec=pl.GridSpec(
            grid=grid,
            in_specs=[
                # Activations: tiled over batch, double-buffered by Pallas.
                pl.BlockSpec((TB, IN_DIM), lambda i: (i, 0)),
                # Weights/biases: constant index_map -> resident across steps.
                # (Could add pipeline_mode=pl.Buffered(1) to reclaim the second
                #  buffer on v7x; left default for maximum portability.)
                pl.BlockSpec((IN_DIM, HID_DIM), lambda i: (0, 0)),
                pl.BlockSpec((1, HID_DIM), lambda i: (0, 0)),
                pl.BlockSpec((HID_DIM, OUT_PAD), lambda i: (0, 0)),
                pl.BlockSpec((1, OUT_PAD), lambda i: (0, 0)),
            ],
            out_specs=pl.BlockSpec((TB, OUT_PAD), lambda i: (i, 0)),
        ),
        compiler_params=pltpu.CompilerParams(
            dimension_semantics=("parallel",),   # megacore on v7x, no-op elsewhere
        ),
        cost_estimate=cost,
    )(x_bf, w1_bf, b1_2d, w2_pad, b2_pad)

    return out_pad[:B, :OUT_DIM]


def init_params(key):
    """Deterministic parameter init matching nn.Linear shapes.

    PyTorch stores fc weights as (out, in); we store them transposed (in, out)
    so the kernel can do x @ W directly.
    """
    k1, k2, k3, k4 = jax.random.split(key, 4)
    # nn.Linear default init: U(-1/sqrt(fan_in), 1/sqrt(fan_in))
    bound1 = 1.0 / jnp.sqrt(784.0)
    bound2 = 1.0 / jnp.sqrt(512.0)
    w1 = jax.random.uniform(k1, (IN_DIM, HID_DIM), jnp.float32, -bound1, bound1)
    b1 = jax.random.uniform(k2, (HID_DIM,), jnp.float32, -bound1, bound1)
    w2 = jax.random.uniform(k3, (HID_DIM, OUT_DIM), jnp.float32, -bound2, bound2)
    b2 = jax.random.uniform(k4, (OUT_DIM,), jnp.float32, -bound2, bound2)
    return w1, b1, w2, b2


if __name__ == "__main__":
    key = jax.random.PRNGKey(0)
    k_x, k_p = jax.random.split(key)

    B = 8
    x = jax.random.normal(k_x, (B, 1, 28, 28), jnp.float32)  # NCHW like MNIST
    w1, b1, w2, b2 = init_params(k_p)

    out = net_forward(x, w1, b1, w2, b2)
    out = jax.block_until_ready(out)

    # reference check in plain JAX (f32); bf16 inputs -> loosened tolerance
    x_flat = x.reshape(B, IN_DIM)
    ref = jnp.maximum(x_flat @ w1 + b1, 0.0) @ w2 + b2
    assert out.shape == (B, OUT_DIM)
    assert jnp.allclose(out, ref, atol=2e-2, rtol=2e-2)

    print("KERNEL_OK")
</pallas_src>

<mosaic_0001>
module attributes {stable_mosaic.version = 11 : i64} {
  func.func @mlp_kernel(%arg0: i32, %arg1: memref<8x784xbf16, #tpu.memory_space<vmem>>, %arg2: memref<784x512xbf16, #tpu.memory_space<vmem>>, %arg3: memref<1x512xf32, #tpu.memory_space<vmem>>, %arg4: memref<512x128xf32, #tpu.memory_space<vmem>>, %arg5: memref<1x128xf32, #tpu.memory_space<vmem>>, %arg6: memref<8x128xf32, #tpu.memory_space<vmem>>) attributes {dimension_semantics = [#tpu.dimension_semantics<parallel>], iteration_bounds = array<i64: 1>, scalar_prefetch = 0 : i64, scratch_operands = 0 : i64, tpu.core_type = #tpu.core_type<tc>, window_params = [{transform_indices = @transform_0, window_bounds = array<i64: 8, 784>}, {pipeline_mode = #tpu.pipeline_mode<synchronous>, transform_indices = @transform_1, window_bounds = array<i64: 784, 512>}, {pipeline_mode = #tpu.pipeline_mode<synchronous>, transform_indices = @transform_2, window_bounds = array<i64: 1, 512>}, {pipeline_mode = #tpu.pipeline_mode<synchronous>, transform_indices = @transform_3, window_bounds = array<i64: 512, 128>}, {pipeline_mode = #tpu.pipeline_mode<synchronous>, transform_indices = @transform_4, window_bounds = array<i64: 1, 128>}, {transform_indices = @transform_5, window_bounds = array<i64: 8, 128>}]} {
    %c0 = arith.constant 0 : index
    %c0_0 = arith.constant 0 : index
    %0 = vector.load %arg1[%c0, %c0_0] : memref<8x784xbf16, #tpu.memory_space<vmem>>, vector<8x784xbf16>
    %c0_1 = arith.constant 0 : index
    %c0_2 = arith.constant 0 : index
    %1 = vector.load %arg2[%c0_1, %c0_2] : memref<784x512xbf16, #tpu.memory_space<vmem>>, vector<784x512xbf16>
    %cst = arith.constant dense<0.000000e+00> : vector<8x512xf32>
    %2 = tpu.matmul %0, %1, %cst {dimension_numbers = #tpu.dot_dimension_numbers<[1], [0], [0], [1], [0, 0, 1, 1], [], []>} : vector<8x784xbf16>, vector<784x512xbf16>, vector<8x512xf32> -> vector<8x512xf32>
    %c0_3 = arith.constant 0 : index
    %c0_4 = arith.constant 0 : index
    %3 = vector.load %arg3[%c0_3, %c0_4] : memref<1x512xf32, #tpu.memory_space<vmem>>, vector<1x512xf32>
    %4 = vector.broadcast %3 : vector<1x512xf32> to vector<8x512xf32>
    %5 = arith.addf %2, %4 : vector<8x512xf32>
    %cst_5 = arith.constant 0.000000e+00 : f32
    %6 = vector.broadcast %cst_5 : f32 to vector<8x512xf32>
    %7 = arith.maximumf %5, %6 : vector<8x512xf32>
    %c0_6 = arith.constant 0 : index
    %c0_7 = arith.constant 0 : index
    %8 = vector.load %arg4[%c0_6, %c0_7] : memref<512x128xf32, #tpu.memory_space<vmem>>, vector<512x128xf32>
    %cst_8 = arith.constant dense<0.000000e+00> : vector<8x128xf32>
    %9 = tpu.matmul %7, %8, %cst_8 {dimension_numbers = #tpu.dot_dimension_numbers<[1], [0], [0], [1], [0, 0, 1, 1], [], []>} : vector<8x512xf32>, vector<512x128xf32>, vector<8x128xf32> -> vector<8x128xf32>
    %c0_9 = arith.constant 0 : index
    %c0_10 = arith.constant 0 : index
    %10 = vector.load %arg5[%c0_9, %c0_10] : memref<1x128xf32, #tpu.memory_space<vmem>>, vector<1x128xf32>
    %11 = vector.broadcast %10 : vector<1x128xf32> to vector<8x128xf32>
    %12 = arith.addf %9, %11 : vector<8x128xf32>
    %c0_11 = arith.constant 0 : index
    %c0_12 = arith.constant 0 : index
    %13 = vector.load %arg6[%c0_11, %c0_12] : memref<8x128xf32, #tpu.memory_space<vmem>>, vector<8x128xf32>
    tpu.vector_store %arg6[%c0_11, %c0_12], %12 {strides = array<i32>} : memref<8x128xf32, #tpu.memory_space<vmem>>, vector<8x128xf32>,
    return
  }
  func.func @transform_0(%arg0: i32) -> (i32, i32) {
    %c0_i32 = arith.constant 0 : i32
    %c0_i32_0 = arith.constant 0 : i32
    return %arg0, %c0_i32 : i32, i32
  }
  func.func @transform_1(%arg0: i32) -> (i32, i32) {
    %c0_i32 = arith.constant 0 : i32
    %c0_i32_0 = arith.constant 0 : i32
    %c0_i32_1 = arith.constant 0 : i32
    return %c0_i32, %c0_i32_0 : i32, i32
  }
  func.func @transform_2(%arg0: i32) -> (i32, i32) {
    %c0_i32 = arith.constant 0 : i32
    %c0_i32_0 = arith.constant 0 : i32
    %c0_i32_1 = arith.constant 0 : i32
    return %c0_i32, %c0_i32_0 : i32, i32
  }
  func.func @transform_3(%arg0: i32) -> (i32, i32) {
    %c0_i32 = arith.constant 0 : i32
    %c0_i32_0 = arith.constant 0 : i32
    %c0_i32_1 = arith.constant 0 : i32
    return %c0_i32, %c0_i32_0 : i32, i32
  }
  func.func @transform_4(%arg0: i32) -> (i32, i32) {
    %c0_i32 = arith.constant 0 : i32
    %c0_i32_0 = arith.constant 0 : i32
    %c0_i32_1 = arith.constant 0 : i32
    return %c0_i32, %c0_i32_0 : i32, i32
  }
  func.func @transform_5(%arg0: i32) -> (i32, i32) {
    %c0_i32 = arith.constant 0 : i32
    %c0_i32_0 = arith.constant 0 : i32
    return %arg0, %c0_i32 : i32, i32
  }
}

</mosaic_0001>

<llo_original>
// kernel: tpu_custom_call.1
$region0: #{tpu_custom_call.1}
  #allocation0 [shape = 'u32[]', space=smem, size = 0x4, offset = 0x4, fixed_abs, tag = 'smem constant byte address 0x4 - core index']
  #allocation1 [shape = 'u32[144,128]{1,0:T(1,128)}', space=vmem, size = 0x12000, scoped, tag = 'internal scratch']
  %s0 = inlined_call_operand.hbm [shape: bf16[8,784], index: 0, kind: input, shape index: {}]
  %s1 = inlined_call_operand.hbm [shape: bf16[784,512], index: 1, kind: input, shape index: {}]
  %s2 = inlined_call_operand.hbm [shape: f32[1,512], index: 2, kind: input, shape index: {}]
  %s3 = inlined_call_operand.hbm [shape: f32[512,128], index: 3, kind: input, shape index: {}]
  %s4 = inlined_call_operand.vmem [shape: f32[1,128], index: 4, kind: input, shape index: {}]
  %s5 = inlined_call_operand.hbm [shape: f32[8,128], index: 5, kind: output, shape index: {}]
  %s6 = sld [smem:[#allocation0]]
  $region46: #{tpu_custom_call.1} parent=0
    _
  %s8 = ssub.s32 1, %s6
  %s9 = scalar_select 0, %s8, %s6
  $region1: #{tpu_custom_call.1} parent=0
    #allocation2 [shape = 'u8[14336]{0}', space=vmem, size = 0x3800, scoped, tag = 'input window, operand 0, single buffered']
    #allocation3 [shape = 's32[1]{0}', space=sflag, size = 0x4, scoped, tag = 'scoped memory for tpu_custom_call.1']
    #allocation4 [shape = 's32[1]{0}', space=sflag, size = 0x4, scoped, tag = 'scoped memory for tpu_custom_call.1']
    #allocation5 [shape = 'u8[802816]{0}', space=vmem, size = 0xc4000, scoped, tag = 'input window, operand 1, single buffered']
    #allocation6 [shape = 's32[1]{0}', space=sflag, size = 0x4, scoped, tag = 'scoped memory for tpu_custom_call.1']
    #allocation7 [shape = 'u8[2048]{0}', space=vmem, size = 0x800, scoped, tag = 'input window, operand 2, single buffered']
    #allocation8 [shape = 'u8[262144]{0}', space=vmem, size = 0x40000, scoped, tag = 'input window, operand 3, single buffered']
    #allocation9 [shape = 's32[1]{0}', space=sflag, size = 0x4, scoped, tag = 'scoped memory for tpu_custom_call.1']
    #allocation10 [shape = 'u8[4096]{0}', space=vmem, size = 0x1000, scoped, tag = 'output window, operand 0, single buffered']
    %10 = vsyncpa [#allocation3], 0
    %11 = vsyncpa [#allocation6], 0
    %12 = vsyncpa [#allocation9], 0
    %13 = vsyncpa [#allocation4], 0
    // Predicated region
    $region2: #{tpu_custom_call.1} parent=1 // pred_check
      _
    $region3: #{tpu_custom_call.1} parent=1 // pred_check_branch
      %15 = sbr.rel (0) target = $region5
    $region4: #{tpu_custom_call.1} parent=1 // pred_region
      %s17 = ssub.s32 448, 448
      %18 = vsyncadd [#allocation3], %s17
      %s20 = sshll.u32 [#allocation2], 4
      %s21 = int_to_ptr.vmem [resolvable:$true] %s20
      %23 = dma.hbm_to_vmem [thread:$0]  %s0, 448, %s21, [#allocation3]
    $region5: #{tpu_custom_call.1} parent=1 // pred_fallthru
      _
    // Predicated region
    $region6: #{tpu_custom_call.1} parent=1 // pred_check
      _
    $region7: #{tpu_custom_call.1} parent=1 // pred_check_branch
      %25 = sbr.rel (0) target = $region9
    $region8: #{tpu_custom_call.1} parent=1 // pred_region
      %s27 = ssub.s32 25088, 25088
      %28 = vsyncadd [#allocation6], %s27
      %s29 = sshll.u32 [#allocation5], 4
      %s30 = int_to_ptr.vmem [resolvable:$true] %s29
      %35 = dma.hbm_to_vmem [thread:$0]  %s1, 25088, %s30, [#allocation6], 256, 256, 16
    $region9: #{tpu_custom_call.1} parent=1 // pred_fallthru
      _
    // Predicated region
    $region10: #{tpu_custom_call.1} parent=1 // pred_check
      _
    $region11: #{tpu_custom_call.1} parent=1 // pred_check_branch
      %37 = sbr.rel (0) target = $region13
    $region12: #{tpu_custom_call.1} parent=1 // pred_region
      %s39 = ssub.s32 64, 64
      %40 = vsyncadd [#allocation6], %s39
      %s42 = sshll.u32 [#allocation7], 4
      %s43 = int_to_ptr.vmem [resolvable:$true] %s42
      %45 = dma.hbm_to_vmem [thread:$0]  %s2, 64, %s43, [#allocation6]
    $region13: #{tpu_custom_call.1} parent=1 // pred_fallthru
      _
    // Predicated region
    $region14: #{tpu_custom_call.1} parent=1 // pred_check
      _
    $region15: #{tpu_custom_call.1} parent=1 // pred_check_branch
      %47 = sbr.rel (0) target = $region17
    $region16: #{tpu_custom_call.1} parent=1 // pred_region
      %s49 = ssub.s32 8192, 8192
      %50 = vsyncadd [#allocation9], %s49
      %s51 = sshll.u32 [#allocation8], 4
      %s52 = int_to_ptr.vmem [resolvable:$true] %s51
      %57 = dma.hbm_to_vmem [thread:$0]  %s3, 8192, %s52, [#allocation9], 128, 128, 8
    $region17: #{tpu_custom_call.1} parent=1 // pred_fallthru
      _
    // Predicated region
    $region18: #{tpu_custom_call.1} parent=1 // pred_check
      _
    $region19: #{tpu_custom_call.1} parent=1 // pred_check_branch
      %59 = sbr.rel (0) target = $region21
    $region20: #{tpu_custom_call.1} parent=1 // pred_region
      _
    $region21: #{tpu_custom_call.1} parent=1 // pred_fallthru
      _
    // Predicated region
    $region22: #{tpu_custom_call.1} parent=1 // pred_check
      _
    $region23: #{tpu_custom_call.1} parent=1 // pred_check_branch
      %61 = sbr.rel (0) target = $region25
    $region24: #{tpu_custom_call.1} parent=1 // pred_region
      %62 = dma.done [#allocation3], 448
    $region25: #{tpu_custom_call.1} parent=1 // pred_fallthru
      _
    // Predicated region
    $region26: #{tpu_custom_call.1} parent=1 // pred_check
      _
    $region27: #{tpu_custom_call.1} parent=1 // pred_check_branch
      %64 = sbr.rel (0) target = $region29
    $region28: #{tpu_custom_call.1} parent=1 // pred_region
      %65 = dma.done [#allocation6], 25088
    $region29: #{tpu_custom_call.1} parent=1 // pred_fallthru
      _
    // Predicated region
    $region30: #{tpu_custom_call.1} parent=1 // pred_check
      _
    $region31: #{tpu_custom_call.1} parent=1 // pred_check_branch
      %67 = sbr.rel (0) target = $region33
    $region32: #{tpu_custom_call.1} parent=1 // pred_region
      %68 = dma.done [#allocation6], 64
    $region33: #{tpu_custom_call.1} parent=1 // pred_fallthru
      _
    // Predicated region
    $region34: #{tpu_custom_call.1} parent=1 // pred_check
      _
    $region35: #{tpu_custom_call.1} parent=1 // pred_check_branch
      %70 = sbr.rel (0) target = $region37
    $region36: #{tpu_custom_call.1} parent=1 // pred_region
      %71 = dma.done [#allocation9], 8192
    $region37: #{tpu_custom_call.1} parent=1 // pred_fallthru
      _
    %v73 = vld [vmem:[#allocation2] sm:$0xff]
    %v74 = vld [vmem:[#allocation2 + $0x8] sm:$0xff]
    %v75 = vld [vmem:[#allocation2 + $0x10] sm:$0xff]
    %v76 = vld [vmem:[#allocation2 + $0x18] sm:$0xf]
    %v77 = vld [vmem:[#allocation5] sm:$0xff]
    %v78 = vld [vmem:[#allocation5 + $0x8] sm:$0xff]
    %v79 = vld [vmem:[#allocation5 + $0x10] sm:$0xff]
    %v80 = vld [vmem:[#allocation5 + $0x18] sm:$0xff]
    %v81 = vld [vmem:[#allocation5 + $0x20] sm:$0xff]
    %v82 = vld [vmem:[#allocation5 + $0x28] sm:$0xff]
    %v83 = vld [vmem:[#allocation5 + $0x30] sm:$0xff]
    %v84 = vld [vmem:[#allocation5 + $0x38] sm:$0xff]
    %v85 = vld [vmem:[#allocation5 + $0x40] sm:$0xff]
    %v86 = vld [vmem:[#allocation5 + $0x48] sm:$0xff]
    %v87 = vld [vmem:[#allocation5 + $0x50] sm:$0xff]
    %v88 = vld [vmem:[#allocation5 + $0x58] sm:$0xff]
    %v89 = vld [vmem:[#allocation5 + $0x60] sm:$0xff]
    %v90 = vld [vmem:[#allocation5 + $0x68] sm:$0xff]
    %v91 = vld [vmem:[#allocation5 + $0x70] sm:$0xff]
    %v92 = vld [vmem:[#allocation5 + $0x78] sm:$0xff]
    %v93 = vld [vmem:[#allocation5 + $0x80] sm:$0xff]
    %v94 = vld [vmem:[#allocation5 + $0x88] sm:$0xff]
    %v95 = vld [vmem:[#allocation5 + $0x90] sm:$0xff]
    %v96 = vld [vmem:[#allocation5 + $0x98] sm:$0xff]
    %v97 = vld [vmem:[#allocation5 + $0xa0] sm:$0xff]
    %v98 = vld [vmem:[#allocation5 + $0xa8] sm:$0xff]
    %v99 = vld [vmem:[#allocation5 + $0xb0] sm:$0xff]
    %v100 = vld [vmem:[#allocation5 + $0xb8] sm:$0xff]
    %v101 = vld [vmem:[#allocation5 + $0xc0] sm:$0xff]
    %v102 = vld [vmem:[#allocation5 + $0xc8] sm:$0xff]
    %v103 = vld [vmem:[#allocation5 + $0xd0] sm:$0xff]
    %v104 = vld [vmem:[#allocation5 + $0xd8] sm:$0xff]
    %v105 = vld [vmem:[#allocation5 + $0xe0] sm:$0xff]
    %v106 = vld [vmem:[#allocation5 + $0xe8] sm:$0xff]
    %v107 = vld [vmem:[#allocation5 + $0xf0] sm:$0xff]
    %v108 = vld [vmem:[#allocation5 + $0xf8] sm:$0xff]
    %v109 = vld [vmem:[#allocation5 + $0x100] sm:$0xff]
    %v110 = vld [vmem:[#allocation5 + $0x108] sm:$0xff]
    %v111 = vld [vmem:[#allocation5 + $0x110] sm:$0xff]
    %v112 = vld [vmem:[#allocation5 + $0x118] sm:$0xff]
    %v113 = vld [vmem:[#allocation5 + $0x120] sm:$0xff]
    %v114 = vld [vmem:[#allocation5 + $0x128] sm:$0xff]
    %v115 = vld [vmem:[#allocation5 + $0x130] sm:$0xff]
    %v116 = vld [vmem:[#allocation5 + $0x138] sm:$0xff]
    %v117 = vld [vmem:[#allocation5 + $0x140] sm:$0xff]
    %v118 = vld [vmem:[#allocation5 + $0x148] sm:$0xff]
    %v119 = vld [vmem:[#allocation5 + $0x150] sm:$0xff]
    %v120 = vld [vmem:[#allocation5 + $0x158] sm:$0xff]
    %v121 = vld [vmem:[#allocation5 + $0x160] sm:$0xff]
    %v122 = vld [vmem:[#allocation5 + $0x168] sm:$0xff]
    %v123 = vld [vmem:[#allocation5 + $0x170] sm:$0xff]
    %v124 = vld [vmem:[#allocation5 + $0x178] sm:$0xff]
    %v125 = vld [vmem:[#allocation5 + $0x180] sm:$0xff]
    %v126 = vld [vmem:[#allocation5 + $0x188] sm:$0xff]
    %v127 = vld [vmem:[#allocation5 + $0x190] sm:$0xff]
    %v128 = vld [vmem:[#allocation5 + $0x198] sm:$0xff]
    %v129 = vld [vmem:[#allocation5 + $0x1a0] sm:$0xff]
    %v130 = vld [vmem:[#allocation5 + $0x1a8] sm:$0xff]
    %v131 = vld [vmem:[#allocation5 + $0x1b0] sm:$0xff]
    %v132 = vld [vmem:[#allocation5 + $0x1b8] sm:$0xff]
    %v133 = vld [vmem:[#allocation5 + $0x1c0] sm:$0xff]
    %v134 = vld [vmem:[#allocation5 + $0x1c8] sm:$0xff]
    %v135 = vld [vmem:[#allocation5 + $0x1d0] sm:$0xff]
    %v136 = vld [vmem:[#allocation5 + $0x1d8] sm:$0xff]
    %v137 = vld [vmem:[#allocation5 + $0x1e0] sm:$0xff]
    %v138 = vld [vmem:[#allocation5 + $0x1e8] sm:$0xff]
    %v139 = vld [vmem:[#allocation5 + $0x1f0] sm:$0xff]
    %v140 = vld [vmem:[#allocation5 + $0x1f8] sm:$0xff]
    %v141 = vld [vmem:[#allocation5 + $0x200] sm:$0xff]
    %v142 = vld [vmem:[#allocation5 + $0x208] sm:$0xff]
    %v143 = vld [vmem:[#allocation5 + $0x210] sm:$0xff]
    %v144 = vld [vmem:[#allocation5 + $0x218] sm:$0xff]
    %v145 = vld [vmem:[#allocation5 + $0x220] sm:$0xff]
    %v146 = vld [vmem:[#allocation5 + $0x228] sm:$0xff]
    %v147 = vld [vmem:[#allocation5 + $0x230] sm:$0xff]
    %v148 = vld [vmem:[#allocation5 + $0x238] sm:$0xff]
    %v149 = vld [vmem:[#allocation5 + $0x240] sm:$0xff]
    %v150 = vld [vmem:[#allocation5 + $0x248] sm:$0xff]
    %v151 = vld [vmem:[#allocation5 + $0x250] sm:$0xff]
    %v152 = vld [vmem:[#allocation5 + $0x258] sm:$0xff]
    %v153 = vld [vmem:[#allocation5 + $0x260] sm:$0xff]
    %v154 = vld [vmem:[#allocation5 + $0x268] sm:$0xff]
    %v155 = vld [vmem:[#allocation5 + $0x270] sm:$0xff]
    %v156 = vld [vmem:[#allocation5 + $0x278] sm:$0xff]
    %v157 = vld [vmem:[#allocation5 + $0x280] sm:$0xff]
    %v158 = vld [vmem:[#allocation5 + $0x288] sm:$0xff]
    %v159 = vld [vmem:[#allocation5 + $0x290] sm:$0xff]
    %v160 = vld [vmem:[#allocation5 + $0x298] sm:$0xff]
    %v161 = vld [vmem:[#allocation5 + $0x2a0] sm:$0xff]
    %v162 = vld [vmem:[#allocation5 + $0x2a8] sm:$0xff]
    %v163 = vld [vmem:[#allocation5 + $0x2b0] sm:$0xff]
    %v164 = vld [vmem:[#allocation5 + $0x2b8] sm:$0xff]
    %v165 = vld [vmem:[#allocation5 + $0x2c0] sm:$0xff]
    %v166 = vld [vmem:[#allocation5 + $0x2c8] sm:$0xff]
    %v167 = vld [vmem:[#allocation5 + $0x2d0] sm:$0xff]
    %v168 = vld [vmem:[#allocation5 + $0x2d8] sm:$0xff]
    %v169 = vld [vmem:[#allocation5 + $0x2e0] sm:$0xff]
    %v170 = vld [vmem:[#allocation5 + $0x2e8] sm:$0xff]
    %v171 = vld [vmem:[#allocation5 + $0x2f0] sm:$0xff]
    %v172 = vld [vmem:[#allocation5 + $0x2f8] sm:$0xff]
    %v173 = vld [vmem:[#allocation5 + $0x300] sm:$0xff]
    %v174 = vld [vmem:[#allocation5 + $0x308] sm:$0xff]
    %v175 = vld [vmem:[#allocation5 + $0x310] sm:$0xff]
    %v176 = vld [vmem:[#allocation5 + $0x318] sm:$0xff]
    %v177 = vld [vmem:[#allocation5 + $0x320] sm:$0xff]
    %v178 = vld [vmem:[#allocation5 + $0x328] sm:$0xff]
    %v179 = vld [vmem:[#allocation5 + $0x330] sm:$0xff]
    %v180 = vld [vmem:[#allocation5 + $0x338] sm:$0xff]
    %v181 = vld [vmem:[#allocation5 + $0x340] sm:$0xff]
    %v182 = vld [vmem:[#allocation5 + $0x348] sm:$0xff]
    %v183 = vld [vmem:[#allocation5 + $0x350] sm:$0xff]
    %v184 = vld [vmem:[#allocation5 + $0x358] sm:$0xff]
    %v185 = vld [vmem:[#allocation5 + $0x360] sm:$0xff]
    %v186 = vld [vmem:[#allocation5 + $0x368] sm:$0xff]
    %v187 = vld [vmem:[#allocation5 + $0x370] sm:$0xff]
    %v188 = vld [vmem:[#allocation5 + $0x378] sm:$0xff]
    %v189 = vld [vmem:[#allocation5 + $0x380] sm:$0xff]
    %v190 = vld [vmem:[#allocation5 + $0x388] sm:$0xff]
    %v191 = vld [vmem:[#allocation5 + $0x390] sm:$0xff]
    %v192 = vld [vmem:[#allocation5 + $0x398] sm:$0xff]
    %v193 = vld [vmem:[#allocation5 + $0x3a0] sm:$0xff]
    %v194 = vld [vmem:[#allocation5 + $0x3a8] sm:$0xff]
    %v195 = vld [vmem:[#allocation5 + $0x3b0] sm:$0xff]
    %v196 = vld [vmem:[#allocation5 + $0x3b8] sm:$0xff]
    %v197 = vld [vmem:[#allocation5 + $0x3c0] sm:$0xff]
    %v198 = vld [vmem:[#allocation5 + $0x3c8] sm:$0xff]
    %v199 = vld [vmem:[#allocation5 + $0x3d0] sm:$0xff]
    %v200 = vld [vmem:[#allocation5 + $0x3d8] sm:$0xff]
    %v201 = vld [vmem:[#allocation5 + $0x3e0] sm:$0xff]
    %v202 = vld [vmem:[#allocation5 + $0x3e8] sm:$0xff]
    %v203 = vld [vmem:[#allocation5 + $0x3f0] sm:$0xff]
    %v204 = vld [vmem:[#allocation5 + $0x3f8] sm:$0xff]
    %v205 = vld [vmem:[#allocation5 + $0x400] sm:$0xff]
    %v206 = vld [vmem:[#allocation5 + $0x408] sm:$0xff]
    %v207 = vld [vmem:[#allocation5 + $0x410] sm:$0xff]
    %v208 = vld [vmem:[#allocation5 + $0x418] sm:$0xff]
    %v209 = vld [vmem:[#allocation5 + $0x420] sm:$0xff]
    %v210 = vld [vmem:[#allocation5 + $0x428] sm:$0xff]
    %v211 = vld [vmem:[#allocation5 + $0x430] sm:$0xff]
    %v212 = vld [vmem:[#allocation5 + $0x438] sm:$0xff]
    %v213 = vld [vmem:[#allocation5 + $0x440] sm:$0xff]
    %v214 = vld [vmem:[#allocation5 + $0x448] sm:$0xff]
    %v215 = vld [vmem:[#allocation5 + $0x450] sm:$0xff]
    %v216 = vld [vmem:[#allocation5 + $0x458] sm:$0xff]
    %v217 = vld [vmem:[#allocation5 + $0x460] sm:$0xff]
    %v218 = vld [vmem:[#allocation5 + $0x468] sm:$0xff]
    %v219 = vld [vmem:[#allocation5 + $0x470] sm:$0xff]
    %v220 = vld [vmem:[#allocation5 + $0x478] sm:$0xff]
    %v221 = vld [vmem:[#allocation5 + $0x480] sm:$0xff]
    %v222 = vld [vmem:[#allocation5 + $0x488] sm:$0xff]
    %v223 = vld [vmem:[#allocation5 + $0x490] sm:$0xff]
    %v224 = vld [vmem:[#allocation5 + $0x498] sm:$0xff]
    %v225 = vld [vmem:[#allocation5 + $0x4a0] sm:$0xff]
    %v226 = vld [vmem:[#allocation5 + $0x4a8] sm:$0xff]
    %v227 = vld [vmem:[#allocation5 + $0x4b0] sm:$0xff]
    %v228 = vld [vmem:[#allocation5 + $0x4b8] sm:$0xff]
    %v229 = vld [vmem:[#allocation5 + $0x4c0] sm:$0xff]
    %v230 = vld [vmem:[#allocation5 + $0x4c8] sm:$0xff]
    %v231 = vld [vmem:[#allocation5 + $0x4d0] sm:$0xff]
    %v232 = vld [vmem:[#allocation5 + $0x4d8] sm:$0xff]
    %v233 = vld [vmem:[#allocation5 + $0x4e0] sm:$0xff]
    %v234 = vld [vmem:[#allocation5 + $0x4e8] sm:$0xff]
    %v235 = vld [vmem:[#allocation5 + $0x4f0] sm:$0xff]
    %v236 = vld [vmem:[#allocation5 + $0x4f8] sm:$0xff]
    %v237 = vld [vmem:[#allocation5 + $0x500] sm:$0xff]
    %v238 = vld [vmem:[#allocation5 + $0x508] sm:$0xff]
    %v239 = vld [vmem:[#allocation5 + $0x510] sm:$0xff]
    %v240 = vld [vmem:[#allocation5 + $0x518] sm:$0xff]
    %v241 = vld [vmem:[#allocation5 + $0x520] sm:$0xff]
    %v242 = vld [vmem:[#allocation5 + $0x528] sm:$0xff]
    %v243 = vld [vmem:[#allocation5 + $0x530] sm:$0xff]
    %v244 = vld [vmem:[#allocation5 + $0x538] sm:$0xff]
    %v245 = vld [vmem:[#allocation5 + $0x540] sm:$0xff]
    %v246 = vld [vmem:[#allocation5 + $0x548] sm:$0xff]
    %v247 = vld [vmem:[#allocation5 + $0x550] sm:$0xff]
    %v248 = vld [vmem:[#allocation5 + $0x558] sm:$0xff]
    %v249 = vld [vmem:[#allocation5 + $0x560] sm:$0xff]
    %v250 = vld [vmem:[#allocation5 + $0x568] sm:$0xff]
    %v251 = vld [vmem:[#allocation5 + $0x570] sm:$0xff]
    %v252 = vld [vmem:[#allocation5 + $0x578] sm:$0xff]
    %v253 = vld [vmem:[#allocation5 + $0x580] sm:$0xff]
    %v254 = vld [vmem:[#allocation5 + $0x588] sm:$0xff]
    %v255 = vld [vmem:[#allocation5 + $0x590] sm:$0xff]
    %v256 = vld [vmem:[#allocation5 + $0x598] sm:$0xff]
    %v257 = vld [vmem:[#allocation5 + $0x5a0] sm:$0xff]
    %v258 = vld [vmem:[#allocation5 + $0x5a8] sm:$0xff]
    %v259 = vld [vmem:[#allocation5 + $0x5b0] sm:$0xff]
    %v260 = vld [vmem:[#allocation5 + $0x5b8] sm:$0xff]
    %v261 = vld [vmem:[#allocation5 + $0x5c0] sm:$0xff]
    %v262 = vld [vmem:[#allocation5 + $0x5c8] sm:$0xff]
    %v263 = vld [vmem:[#allocation5 + $0x5d0] sm:$0xff]
    %v264 = vld [vmem:[#allocation5 + $0x5d8] sm:$0xff]
    %v265 = vld [vmem:[#allocation5 + $0x5e0] sm:$0xff]
    %v266 = vld [vmem:[#allocation5 + $0x5e8] sm:$0xff]
    %v267 = vld [vmem:[#allocation5 + $0x5f0] sm:$0xff]
    %v268 = vld [vmem:[#allocation5 + $0x5f8] sm:$0xff]
    %v269 = vld [vmem:[#allocation5 + $0x600] sm:$0xff]
    %v270 = vld [vmem:[#allocation5 + $0x608] sm:$0xff]
    %v271 = vld [vmem:[#allocation5 + $0x610] sm:$0xff]
    %v272 = vld [vmem:[#allocation5 + $0x618] sm:$0xff]
    %v273 = vld [vmem:[#allocation7] sm:$0xf]
    %v275 = vlaneseq
    %v276 = vshrl.u32 %v275, 7
    %v277 = vsub.s32 0, %v276
    %v278 = vrot.slane %v273, %v277
    %v279 = vlaneseq
    %v280 = vshrl.u32 %v279, 7
    %v281 = vsub.s32 1, %v280
    %v282 = vrot.slane %v273, %v281
    %v283 = vlaneseq
    %v284 = vshrl.u32 %v283, 7
    %v285 = vsub.s32 2, %v284
    %v286 = vrot.slane %v273, %v285
    %v287 = vlaneseq
    %v288 = vshrl.u32 %v287, 7
    %v289 = vsub.s32 3, %v288
    %v290 = vrot.slane %v273, %v289
    %v299 = vunpack.c.l.b16 %v73
    %v300 = vunpack.c.h.b16 %v73
    %v301 = vunpack.c.l.b16 %v74
    %v302 = vunpack.c.h.b16 %v74
    %v303 = vunpack.c.l.b16 %v75
    %v304 = vunpack.c.h.b16 %v75
    %v305 = vunpack.c.l.b16 %v76
    %v306 = vpack.c.b16 %v299, %v299
    %v307 = vpack.c.b16 %v300, %v300
    %v308 = vpack.c.b16 %v301, %v301
    %v309 = vpack.c.b16 %v302, %v302
    %v310 = vpack.c.b16 %v303, %v303
    %v311 = vpack.c.b16 %v304, %v304
    %v312 = vpack.c.b16 %v305, %v305
    %v515 = vunpack.c.l.b16 %v77
    %v516 = vunpack.c.h.b16 %v77
    %v517 = vunpack.c.l.b16 %v78
    %v518 = vunpack.c.h.b16 %v78
    %v519 = vunpack.c.l.b16 %v79
    %v520 = vunpack.c.h.b16 %v79
    %v521 = vunpack.c.l.b16 %v80
    %v522 = vunpack.c.h.b16 %v80
    %v523 = vunpack.c.l.b16 %v81
    %v524 = vunpack.c.h.b16 %v81
    %v525 = vunpack.c.l.b16 %v82
    %v526 = vunpack.c.h.b16 %v82
    %v527 = vunpack.c.l.b16 %v83
    %v528 = vunpack.c.h.b16 %v83
    %v529 = vunpack.c.l.b16 %v84
    %v530 = vunpack.c.h.b16 %v84
    %v531 = vunpack.c.l.b16 %v85
    %v532 = vunpack.c.h.b16 %v85
    %v533 = vunpack.c.l.b16 %v86
    %v534 = vunpack.c.h.b16 %v86
    %v535 = vunpack.c.l.b16 %v87
    %v536 = vunpack.c.h.b16 %v87
    %v537 = vunpack.c.l.b16 %v88
    %v538 = vunpack.c.h.b16 %v88
    %v539 = vunpack.c.l.b16 %v89
    %v540 = vunpack.c.h.b16 %v89
    %v541 = vunpack.c.l.b16 %v90
    %v542 = vunpack.c.h.b16 %v90
    %v543 = vunpack.c.l.b16 %v91
    %v544 = vunpack.c.h.b16 %v91
    %v545 = vunpack.c.l.b16 %v92
    %v546 = vunpack.c.h.b16 %v92
    %v547 = vunpack.c.l.b16 %v93
    %v548 = vunpack.c.h.b16 %v93
    %v549 = vunpack.c.l.b16 %v94
    %v550 = vunpack.c.h.b16 %v94
    %v551 = vunpack.c.l.b16 %v95
    %v552 = vunpack.c.h.b16 %v95
    %v553 = vunpack.c.l.b16 %v96
    %v554 = vunpack.c.h.b16 %v96
    %v555 = vunpack.c.l.b16 %v97
    %v556 = vunpack.c.h.b16 %v97
    %v557 = vunpack.c.l.b16 %v98
    %v558 = vunpack.c.h.b16 %v98
    %v559 = vunpack.c.l.b16 %v99
    %v560 = vunpack.c.h.b16 %v99
    %v561 = vunpack.c.l.b16 %v100
    %v562 = vunpack.c.h.b16 %v100
    %v563 = vunpack.c.l.b16 %v101
    %v564 = vunpack.c.h.b16 %v101
    %v565 = vunpack.c.l.b16 %v102
    %v566 = vunpack.c.h.b16 %v102
    %v567 = vunpack.c.l.b16 %v103
    %v568 = vunpack.c.h.b16 %v103
    %v569 = vunpack.c.l.b16 %v104
    %v570 = vunpack.c.h.b16 %v104
    %v571 = vunpack.c.l.b16 %v105
    %v572 = vunpack.c.h.b16 %v105
    %v573 = vunpack.c.l.b16 %v106
    %v574 = vunpack.c.h.b16 %v106
    %v575 = vunpack.c.l.b16 %v107
    %v576 = vunpack.c.h.b16 %v107
    %v577 = vunpack.c.l.b16 %v108
    %v578 = vunpack.c.h.b16 %v108
    %v579 = vunpack.c.l.b16 %v109
    %v580 = vunpack.c.h.b16 %v109
    %v581 = vunpack.c.l.b16 %v110
    %v582 = vunpack.c.h.b16 %v110
    %v583 = vunpack.c.l.b16 %v111
    %v584 = vunpack.c.h.b16 %v111
    %v585 = vunpack.c.l.b16 %v112
    %v586 = vunpack.c.h.b16 %v112
    %v587 = vunpack.c.l.b16 %v113
    %v588 = vunpack.c.h.b16 %v113
    %v589 = vunpack.c.l.b16 %v114
    %v590 = vunpack.c.h.b16 %v114
    %v591 = vunpack.c.l.b16 %v115
    %v592 = vunpack.c.h.b16 %v115
    %v593 = vunpack.c.l.b16 %v116
    %v594 = vunpack.c.h.b16 %v116
    %v595 = vunpack.c.l.b16 %v117
    %v596 = vunpack.c.h.b16 %v117
    %v597 = vunpack.c.l.b16 %v118
    %v598 = vunpack.c.h.b16 %v118
    %v599 = vunpack.c.l.b16 %v119
    %v600 = vunpack.c.h.b16 %v119
    %v601 = vunpack.c.l.b16 %v120
    %v602 = vunpack.c.h.b16 %v120
    %v603 = vunpack.c.l.b16 %v121
    %v604 = vunpack.c.h.b16 %v121
    %v605 = vunpack.c.l.b16 %v122
    %v606 = vunpack.c.h.b16 %v122
    %v607 = vunpack.c.l.b16 %v123
    %v608 = vunpack.c.h.b16 %v123
    %v609 = vunpack.c.l.b16 %v124
    %v610 = vunpack.c.h.b16 %v124
    %v611 = vunpack.c.l.b16 %v125
    %v612 = vunpack.c.h.b16 %v125
    %v613 = vunpack.c.l.b16 %v126
    %v614 = vunpack.c.h.b16 %v126
    %v615 = vunpack.c.l.b16 %v127
    %v616 = vunpack.c.h.b16 %v127
    %v617 = vunpack.c.l.b16 %v128
    %v618 = vunpack.c.h.b16 %v128
    %v619 = vunpack.c.l.b16 %v129
    %v620 = vunpack.c.h.b16 %v129
    %v621 = vunpack.c.l.b16 %v130
    %v622 = vunpack.c.h.b16 %v130
    %v623 = vunpack.c.l.b16 %v131
    %v624 = vunpack.c.h.b16 %v131
    %v625 = vunpack.c.l.b16 %v132
    %v626 = vunpack.c.h.b16 %v132
    %v627 = vunpack.c.l.b16 %v133
    %v628 = vunpack.c.h.b16 %v133
    %v629 = vunpack.c.l.b16 %v134
    %v630 = vunpack.c.h.b16 %v134
    %v631 = vunpack.c.l.b16 %v135
    %v632 = vunpack.c.h.b16 %v135
    %v633 = vunpack.c.l.b16 %v136
    %v634 = vunpack.c.h.b16 %v136
    %v635 = vunpack.c.l.b16 %v137
    %v636 = vunpack.c.h.b16 %v137
    %v637 = vunpack.c.l.b16 %v138
    %v638 = vunpack.c.h.b16 %v138
    %v639 = vunpack.c.l.b16 %v139
    %v640 = vunpack.c.h.b16 %v139
    %v641 = vunpack.c.l.b16 %v140
    %v642 = vunpack.c.h.b16 %v140
    %v643 = vunpack.c.l.b16 %v141
    %v644 = vunpack.c.h.b16 %v141
    %v645 = vunpack.c.l.b16 %v142
    %v646 = vunpack.c.h.b16 %v142
    %v647 = vunpack.c.l.b16 %v143
    %v648 = vunpack.c.h.b16 %v143
    %v649 = vunpack.c.l.b16 %v144
    %v650 = vunpack.c.h.b16 %v144
    %v651 = vunpack.c.l.b16 %v145
    %v652 = vunpack.c.h.b16 %v145
    %v653 = vunpack.c.l.b16 %v146
    %v654 = vunpack.c.h.b16 %v146
    %v655 = vunpack.c.l.b16 %v147
    %v656 = vunpack.c.h.b16 %v147
    %v657 = vunpack.c.l.b16 %v148
    %v658 = vunpack.c.h.b16 %v148
    %v659 = vunpack.c.l.b16 %v149
    %v660 = vunpack.c.h.b16 %v149
    %v661 = vunpack.c.l.b16 %v150
    %v662 = vunpack.c.h.b16 %v150
    %v663 = vunpack.c.l.b16 %v151
    %v664 = vunpack.c.h.b16 %v151
    %v665 = vunpack.c.l.b16 %v152
    %v666 = vunpack.c.h.b16 %v152
    %v667 = vunpack.c.l.b16 %v153
    %v668 = vunpack.c.h.b16 %v153
    %v669 = vunpack.c.l.b16 %v154
    %v670 = vunpack.c.h.b16 %v154
    %v671 = vunpack.c.l.b16 %v155
    %v672 = vunpack.c.h.b16 %v155
    %v673 = vunpack.c.l.b16 %v156
    %v674 = vunpack.c.h.b16 %v156
    %v675 = vunpack.c.l.b16 %v157
    %v676 = vunpack.c.h.b16 %v157
    %v677 = vunpack.c.l.b16 %v158
    %v678 = vunpack.c.h.b16 %v158
    %v679 = vunpack.c.l.b16 %v159
    %v680 = vunpack.c.h.b16 %v159
    %v681 = vunpack.c.l.b16 %v160
    %v682 = vunpack.c.h.b16 %v160
    %v683 = vunpack.c.l.b16 %v161
    %v684 = vunpack.c.h.b16 %v161
    %v685 = vunpack.c.l.b16 %v162
    %v686 = vunpack.c.h.b16 %v162
    %v687 = vunpack.c.l.b16 %v163
    %v688 = vunpack.c.h.b16 %v163
    %v689 = vunpack.c.l.b16 %v164
    %v690 = vunpack.c.h.b16 %v164
    %v691 = vunpack.c.l.b16 %v165
    %v692 = vunpack.c.h.b16 %v165
    %v693 = vunpack.c.l.b16 %v166
    %v694 = vunpack.c.h.b16 %v166
    %v695 = vunpack.c.l.b16 %v167
    %v696 = vunpack.c.h.b16 %v167
    %v697 = vunpack.c.l.b16 %v168
    %v698 = vunpack.c.h.b16 %v168
    %v699 = vunpack.c.l.b16 %v169
    %v700 = vunpack.c.h.b16 %v169
    %v701 = vunpack.c.l.b16 %v170
    %v702 = vunpack.c.h.b16 %v170
    %v703 = vunpack.c.l.b16 %v171
    %v704 = vunpack.c.h.b16 %v171
    %v705 = vunpack.c.l.b16 %v172
    %v706 = vunpack.c.h.b16 %v172
    %v707 = vunpack.c.l.b16 %v173
    %v708 = vunpack.c.h.b16 %v173
    %v709 = vunpack.c.l.b16 %v174
    %v710 = vunpack.c.h.b16 %v174
    %v711 = vunpack.c.l.b16 %v175
    %v712 = vunpack.c.h.b16 %v175
    %v713 = vunpack.c.l.b16 %v176
    %v714 = vunpack.c.h.b16 %v176
    %v715 = vunpack.c.l.b16 %v177
    %v716 = vunpack.c.h.b16 %v177
    %v717 = vunpack.c.l.b16 %v178
    %v718 = vunpack.c.h.b16 %v178
    %v719 = vunpack.c.l.b16 %v179
    %v720 = vunpack.c.h.b16 %v179
    %v721 = vunpack.c.l.b16 %v180
    %v722 = vunpack.c.h.b16 %v180
    %v723 = vunpack.c.l.b16 %v181
    %v724 = vunpack.c.h.b16 %v181
    %v725 = vunpack.c.l.b16 %v182
    %v726 = vunpack.c.h.b16 %v182
    %v727 = vunpack.c.l.b16 %v183
    %v728 = vunpack.c.h.b16 %v183
    %v729 = vunpack.c.l.b16 %v184
    %v730 = vunpack.c.h.b16 %v184
    %v731 = vunpack.c.l.b16 %v185
    %v732 = vunpack.c.h.b16 %v185
    %v733 = vunpack.c.l.b16 %v186
    %v734 = vunpack.c.h.b16 %v186
    %v735 = vunpack.c.l.b16 %v187
    %v736 = vunpack.c.h.b16 %v187
    %v737 = vunpack.c.l.b16 %v188
    %v738 = vunpack.c.h.b16 %v188
    %v739 = vunpack.c.l.b16 %v189
    %v740 = vunpack.c.h.b16 %v189
    %v741 = vunpack.c.l.b16 %v190
    %v742 = vunpack.c.h.b16 %v190
    %v743 = vunpack.c.l.b16 %v191
    %v744 = vunpack.c.h.b16 %v191
    %v745 = vunpack.c.l.b16 %v192
    %v746 = vunpack.c.h.b16 %v192
    %v747 = vunpack.c.l.b16 %v193
    %v748 = vunpack.c.h.b16 %v193
    %v749 = vunpack.c.l.b16 %v194
    %v750 = vunpack.c.h.b16 %v194
    %v751 = vunpack.c.l.b16 %v195
    %v752 = vunpack.c.h.b16 %v195
    %v753 = vunpack.c.l.b16 %v196
    %v754 = vunpack.c.h.b16 %v196
    %v755 = vunpack.c.l.b16 %v197
    %v756 = vunpack.c.h.b16 %v197
    %v757 = vunpack.c.l.b16 %v198
    %v758 = vunpack.c.h.b16 %v198
    %v759 = vunpack.c.l.b16 %v199
    %v760 = vunpack.c.h.b16 %v199
    %v761 = vunpack.c.l.b16 %v200
    %v762 = vunpack.c.h.b16 %v200
    %v763 = vunpack.c.l.b16 %v201
    %v764 = vunpack.c.h.b16 %v201
    %v765 = vunpack.c.l.b16 %v202
    %v766 = vunpack.c.h.b16 %v202
    %v767 = vunpack.c.l.b16 %v203
    %v768 = vunpack.c.h.b16 %v203
    %v769 = vunpack.c.l.b16 %v204
    %v770 = vunpack.c.h.b16 %v204
    %v771 = vunpack.c.l.b16 %v205
    %v772 = vunpack.c.h.b16 %v205
    %v773 = vunpack.c.l.b16 %v206
    %v774 = vunpack.c.h.b16 %v206
    %v775 = vunpack.c.l.b16 %v207
    %v776 = vunpack.c.h.b16 %v207
    %v777 = vunpack.c.l.b16 %v208
    %v778 = vunpack.c.h.b16 %v208
    %v779 = vunpack.c.l.b16 %v209
    %v780 = vunpack.c.h.b16 %v209
    %v781 = vunpack.c.l.b16 %v210
    %v782 = vunpack.c.h.b16 %v210
    %v783 = vunpack.c.l.b16 %v211
    %v784 = vunpack.c.h.b16 %v211
    %v785 = vunpack.c.l.b16 %v212
    %v786 = vunpack.c.h.b16 %v212
    %v787 = vunpack.c.l.b16 %v213
    %v788 = vunpack.c.h.b16 %v213
    %v789 = vunpack.c.l.b16 %v214
    %v790 = vunpack.c.h.b16 %v214
    %v791 = vunpack.c.l.b16 %v215
    %v792 = vunpack.c.h.b16 %v215
    %v793 = vunpack.c.l.b16 %v216
    %v794 = vunpack.c.h.b16 %v216
    %v795 = vunpack.c.l.b16 %v217
    %v796 = vunpack.c.h.b16 %v217
    %v797 = vunpack.c.l.b16 %v218
    %v798 = vunpack.c.h.b16 %v218
    %v799 = vunpack.c.l.b16 %v219
    %v800 = vunpack.c.h.b16 %v219
    %v801 = vunpack.c.l.b16 %v220
    %v802 = vunpack.c.h.b16 %v220
    %v803 = vunpack.c.l.b16 %v221
    %v804 = vunpack.c.h.b16 %v221
    %v805 = vunpack.c.l.b16 %v222
    %v806 = vunpack.c.h.b16 %v222
    %v807 = vunpack.c.l.b16 %v223
    %v808 = vunpack.c.h.b16 %v223
    %v809 = vunpack.c.l.b16 %v224
    %v810 = vunpack.c.h.b16 %v224
    %v811 = vunpack.c.l.b16 %v225
    %v812 = vunpack.c.h.b16 %v225
    %v813 = vunpack.c.l.b16 %v226
    %v814 = vunpack.c.h.b16 %v226
    %v815 = vunpack.c.l.b16 %v227
    %v816 = vunpack.c.h.b16 %v227
    %v817 = vunpack.c.l.b16 %v228
    %v818 = vunpack.c.h.b16 %v228
    %v819 = vunpack.c.l.b16 %v229
    %v820 = vunpack.c.h.b16 %v229
    %v821 = vunpack.c.l.b16 %v230
    %v822 = vunpack.c.h.b16 %v230
    %v823 = vunpack.c.l.b16 %v231
    %v824 = vunpack.c.h.b16 %v231
    %v825 = vunpack.c.l.b16 %v232
    %v826 = vunpack.c.h.b16 %v232
    %v827 = vunpack.c.l.b16 %v233
    %v828 = vunpack.c.h.b16 %v233
    %v829 = vunpack.c.l.b16 %v234
    %v830 = vunpack.c.h.b16 %v234
    %v831 = vunpack.c.l.b16 %v235
    %v832 = vunpack.c.h.b16 %v235
    %v833 = vunpack.c.l.b16 %v236
    %v834 = vunpack.c.h.b16 %v236
    %v835 = vunpack.c.l.b16 %v237
    %v836 = vunpack.c.h.b16 %v237
    %v837 = vunpack.c.l.b16 %v238
    %v838 = vunpack.c.h.b16 %v238
    %v839 = vunpack.c.l.b16 %v239
    %v840 = vunpack.c.h.b16 %v239
    %v841 = vunpack.c.l.b16 %v240
    %v842 = vunpack.c.h.b16 %v240
    %v843 = vunpack.c.l.b16 %v241
    %v844 = vunpack.c.h.b16 %v241
    %v845 = vunpack.c.l.b16 %v242
    %v846 = vunpack.c.h.b16 %v242
    %v847 = vunpack.c.l.b16 %v243
    %v848 = vunpack.c.h.b16 %v243
    %v849 = vunpack.c.l.b16 %v244
    %v850 = vunpack.c.h.b16 %v244
    %v851 = vunpack.c.l.b16 %v245
    %v852 = vunpack.c.h.b16 %v245
    %v853 = vunpack.c.l.b16 %v246
    %v854 = vunpack.c.h.b16 %v246
    %v855 = vunpack.c.l.b16 %v247
    %v856 = vunpack.c.h.b16 %v247
    %v857 = vunpack.c.l.b16 %v248
    %v858 = vunpack.c.h.b16 %v248
    %v859 = vunpack.c.l.b16 %v249
    %v860 = vunpack.c.h.b16 %v249
    %v861 = vunpack.c.l.b16 %v250
    %v862 = vunpack.c.h.b16 %v250
    %v863 = vunpack.c.l.b16 %v251
    %v864 = vunpack.c.h.b16 %v251
    %v865 = vunpack.c.l.b16 %v252
    %v866 = vunpack.c.h.b16 %v252
    %v867 = vunpack.c.l.b16 %v253
    %v868 = vunpack.c.h.b16 %v253
    %v869 = vunpack.c.l.b16 %v254
    %v870 = vunpack.c.h.b16 %v254
    %v871 = vunpack.c.l.b16 %v255
    %v872 = vunpack.c.h.b16 %v255
    %v873 = vunpack.c.l.b16 %v256
    %v874 = vunpack.c.h.b16 %v256
    %v875 = vunpack.c.l.b16 %v257
    %v876 = vunpack.c.h.b16 %v257
    %v877 = vunpack.c.l.b16 %v258
    %v878 = vunpack.c.h.b16 %v258
    %v879 = vunpack.c.l.b16 %v259
    %v880 = vunpack.c.h.b16 %v259
    %v881 = vunpack.c.l.b16 %v260
    %v882 = vunpack.c.h.b16 %v260
    %v883 = vunpack.c.l.b16 %v261
    %v884 = vunpack.c.h.b16 %v261
    %v885 = vunpack.c.l.b16 %v262
    %v886 = vunpack.c.h.b16 %v262
    %v887 = vunpack.c.l.b16 %v263
    %v888 = vunpack.c.h.b16 %v263
    %v889 = vunpack.c.l.b16 %v264
    %v890 = vunpack.c.h.b16 %v264
    %v891 = vunpack.c.l.b16 %v265
    %v892 = vunpack.c.h.b16 %v265
    %v893 = vunpack.c.l.b16 %v266
    %v894 = vunpack.c.h.b16 %v266
    %v895 = vunpack.c.l.b16 %v267
    %v896 = vunpack.c.h.b16 %v267
    %v897 = vunpack.c.l.b16 %v268
    %v898 = vunpack.c.h.b16 %v268
    %v899 = vunpack.c.l.b16 %v269
    %v900 = vunpack.c.h.b16 %v269
    %v901 = vunpack.c.l.b16 %v270
    %v902 = vunpack.c.h.b16 %v270
    %v903 = vunpack.c.l.b16 %v271
    %v904 = vunpack.c.h.b16 %v271
    %v905 = vunpack.c.l.b16 %v272
    %v906 = vunpack.c.h.b16 %v272
    %v907 = vpack.c.b16 %v519, %v515
    %v908 = vpack.c.b16 %v520, %v516
    %v909 = vpack.c.b16 %v521, %v517
    %v910 = vpack.c.b16 %v522, %v518
    %v911 = vpack.c.b16 %v527, %v523
    %v912 = vpack.c.b16 %v528, %v524
    %v913 = vpack.c.b16 %v529, %v525
    %v914 = vpack.c.b16 %v530, %v526
    %v915 = vpack.c.b16 %v535, %v531
    %v916 = vpack.c.b16 %v536, %v532
    %v917 = vpack.c.b16 %v537, %v533
    %v918 = vpack.c.b16 %v538, %v534
    %v919 = vpack.c.b16 %v543, %v539
    %v920 = vpack.c.b16 %v544, %v540
    %v921 = vpack.c.b16 %v545, %v541
    %v922 = vpack.c.b16 %v546, %v542
    %v923 = vpack.c.b16 %v551, %v547
    %v924 = vpack.c.b16 %v552, %v548
    %v925 = vpack.c.b16 %v553, %v549
    %v926 = vpack.c.b16 %v554, %v550
    %v927 = vpack.c.b16 %v559, %v555
    %v928 = vpack.c.b16 %v560, %v556
    %v929 = vpack.c.b16 %v561, %v557
    %v930 = vpack.c.b16 %v562, %v558
    %v931 = vpack.c.b16 %v567, %v563
    %v932 = vpack.c.b16 %v568, %v564
    %v933 = vpack.c.b16 %v569, %v565
    %v934 = vpack.c.b16 %v570, %v566
    %v935 = vpack.c.b16 %v575, %v571
    %v936 = vpack.c.b16 %v576, %v572
    %v937 = vpack.c.b16 %v577, %v573
    %v938 = vpack.c.b16 %v578, %v574
    %v939 = vpack.c.b16 %v583, %v579
    %v940 = vpack.c.b16 %v584, %v580
    %v941 = vpack.c.b16 %v585, %v581
    %v942 = vpack.c.b16 %v586, %v582
    %v943 = vpack.c.b16 %v591, %v587
    %v944 = vpack.c.b16 %v592, %v588
    %v945 = vpack.c.b16 %v593, %v589
    %v946 = vpack.c.b16 %v594, %v590
    %v947 = vpack.c.b16 %v599, %v595
    %v948 = vpack.c.b16 %v600, %v596
    %v949 = vpack.c.b16 %v601, %v597
    %v950 = vpack.c.b16 %v602, %v598
    %v951 = vpack.c.b16 %v607, %v603
    %v952 = vpack.c.b16 %v608, %v604
    %v953 = vpack.c.b16 %v609, %v605
    %v954 = vpack.c.b16 %v610, %v606
    %v955 = vpack.c.b16 %v615, %v611
    %v956 = vpack.c.b16 %v616, %v612
    %v957 = vpack.c.b16 %v617, %v613
    %v958 = vpack.c.b16 %v618, %v614
    %v959 = vpack.c.b16 %v623, %v619
    %v960 = vpack.c.b16 %v624, %v620
    %v961 = vpack.c.b16 %v625, %v621
    %v962 = vpack.c.b16 %v626, %v622
    %v963 = vpack.c.b16 %v631, %v627
    %v964 = vpack.c.b16 %v632, %v628
    %v965 = vpack.c.b16 %v633, %v629
    %v966 = vpack.c.b16 %v634, %v630
    %v967 = vpack.c.b16 %v639, %v635
    %v968 = vpack.c.b16 %v640, %v636
    %v969 = vpack.c.b16 %v641, %v637
    %v970 = vpack.c.b16 %v642, %v638
    %v971 = vpack.c.b16 %v647, %v643
    %v972 = vpack.c.b16 %v648, %v644
    %v973 = vpack.c.b16 %v649, %v645
    %v974 = vpack.c.b16 %v650, %v646
    %v975 = vpack.c.b16 %v655, %v651
    %v976 = vpack.c.b16 %v656, %v652
    %v977 = vpack.c.b16 %v657, %v653
    %v978 = vpack.c.b16 %v658, %v654
    %v979 = vpack.c.b16 %v663, %v659
    %v980 = vpack.c.b16 %v664, %v660
    %v981 = vpack.c.b16 %v665, %v661
    %v982 = vpack.c.b16 %v666, %v662
    %v983 = vpack.c.b16 %v671, %v667
    %v984 = vpack.c.b16 %v672, %v668
    %v985 = vpack.c.b16 %v673, %v669
    %v986 = vpack.c.b16 %v674, %v670
    %v987 = vpack.c.b16 %v679, %v675
    %v988 = vpack.c.b16 %v680, %v676
    %v989 = vpack.c.b16 %v681, %v677
    %v990 = vpack.c.b16 %v682, %v678
    %v991 = vpack.c.b16 %v687, %v683
    %v992 = vpack.c.b16 %v688, %v684
    %v993 = vpack.c.b16 %v689, %v685
    %v994 = vpack.c.b16 %v690, %v686
    %v995 = vpack.c.b16 %v695, %v691
    %v996 = vpack.c.b16 %v696, %v692
    %v997 = vpack.c.b16 %v697, %v693
    %v998 = vpack.c.b16 %v698, %v694
    %v999 = vpack.c.b16 %v703, %v699
    %v1000 = vpack.c.b16 %v704, %v700
    %v1001 = vpack.c.b16 %v705, %v701
    %v1002 = vpack.c.b16 %v706, %v702
    %v1003 = vpack.c.b16 %v711, %v707
    %v1004 = vpack.c.b16 %v712, %v708
    %v1005 = vpack.c.b16 %v713, %v709
    %v1006 = vpack.c.b16 %v714, %v710
    %v1007 = vpack.c.b16 %v719, %v715
    %v1008 = vpack.c.b16 %v720, %v716
    %v1009 = vpack.c.b16 %v721, %v717
    %v1010 = vpack.c.b16 %v722, %v718
    %v1011 = vpack.c.b16 %v727, %v723
    %v1012 = vpack.c.b16 %v728, %v724
    %v1013 = vpack.c.b16 %v729, %v725
    %v1014 = vpack.c.b16 %v730, %v726
    %v1015 = vpack.c.b16 %v735, %v731
    %v1016 = vpack.c.b16 %v736, %v732
    %v1017 = vpack.c.b16 %v737, %v733
    %v1018 = vpack.c.b16 %v738, %v734
    %v1019 = vpack.c.b16 %v743, %v739
    %v1020 = vpack.c.b16 %v744, %v740
    %v1021 = vpack.c.b16 %v745, %v741
    %v1022 = vpack.c.b16 %v746, %v742
    %v1023 = vpack.c.b16 %v751, %v747
    %v1024 = vpack.c.b16 %v752, %v748
    %v1025 = vpack.c.b16 %v753, %v749
    %v1026 = vpack.c.b16 %v754, %v750
    %v1027 = vpack.c.b16 %v759, %v755
    %v1028 = vpack.c.b16 %v760, %v756
    %v1029 = vpack.c.b16 %v761, %v757
    %v1030 = vpack.c.b16 %v762, %v758
    %v1031 = vpack.c.b16 %v767, %v763
    %v1032 = vpack.c.b16 %v768, %v764
    %v1033 = vpack.c.b16 %v769, %v765
    %v1034 = vpack.c.b16 %v770, %v766
    %v1035 = vpack.c.b16 %v775, %v771
    %v1036 = vpack.c.b16 %v776, %v772
    %v1037 = vpack.c.b16 %v777, %v773
    %v1038 = vpack.c.b16 %v778, %v774
    %v1039 = vpack.c.b16 %v783, %v779
    %v1040 = vpack.c.b16 %v784, %v780
    %v1041 = vpack.c.b16 %v785, %v781
    %v1042 = vpack.c.b16 %v786, %v782
    %v1043 = vpack.c.b16 %v791, %v787
    %v1044 = vpack.c.b16 %v792, %v788
    %v1045 = vpack.c.b16 %v793, %v789
    %v1046 = vpack.c.b16 %v794, %v790
    %v1047 = vpack.c.b16 %v799, %v795
    %v1048 = vpack.c.b16 %v800, %v796
    %v1049 = vpack.c.b16 %v801, %v797
    %v1050 = vpack.c.b16 %v802, %v798
    %v1051 = vpack.c.b16 %v807, %v803
    %v1052 = vpack.c.b16 %v808, %v804
    %v1053 = vpack.c.b16 %v809, %v805
    %v1054 = vpack.c.b16 %v810, %v806
    %v1055 = vpack.c.b16 %v815, %v811
    %v1056 = vpack.c.b16 %v816, %v812
    %v1057 = vpack.c.b16 %v817, %v813
    %v1058 = vpack.c.b16 %v818, %v814
    %v1059 = vpack.c.b16 %v823, %v819
    %v1060 = vpack.c.b16 %v824, %v820
    %v1061 = vpack.c.b16 %v825, %v821
    %v1062 = vpack.c.b16 %v826, %v822
    %v1063 = vpack.c.b16 %v831, %v827
    %v1064 = vpack.c.b16 %v832, %v828
    %v1065 = vpack.c.b16 %v833, %v829
    %v1066 = vpack.c.b16 %v834, %v830
    %v1067 = vpack.c.b16 %v839, %v835
    %v1068 = vpack.c.b16 %v840, %v836
    %v1069 = vpack.c.b16 %v841, %v837
    %v1070 = vpack.c.b16 %v842, %v838
    %v1071 = vpack.c.b16 %v847, %v843
    %v1072 = vpack.c.b16 %v848, %v844
    %v1073 = vpack.c.b16 %v849, %v845
    %v1074 = vpack.c.b16 %v850, %v846
    %v1075 = vpack.c.b16 %v855, %v851
    %v1076 = vpack.c.b16 %v856, %v852
    %v1077 = vpack.c.b16 %v857, %v853
    %v1078 = vpack.c.b16 %v858, %v854
    %v1079 = vpack.c.b16 %v863, %v859
    %v1080 = vpack.c.b16 %v864, %v860
    %v1081 = vpack.c.b16 %v865, %v861
    %v1082 = vpack.c.b16 %v866, %v862
    %v1083 = vpack.c.b16 %v871, %v867
    %v1084 = vpack.c.b16 %v872, %v868
    %v1085 = vpack.c.b16 %v873, %v869
    %v1086 = vpack.c.b16 %v874, %v870
    %v1087 = vpack.c.b16 %v879, %v875
    %v1088 = vpack.c.b16 %v880, %v876
    %v1089 = vpack.c.b16 %v881, %v877
    %v1090 = vpack.c.b16 %v882, %v878
    %v1091 = vpack.c.b16 %v887, %v883
    %v1092 = vpack.c.b16 %v888, %v884
    %v1093 = vpack.c.b16 %v889, %v885
    %v1094 = vpack.c.b16 %v890, %v886
    %v1095 = vpack.c.b16 %v895, %v891
    %v1096 = vpack.c.b16 %v896, %v892
    %v1097 = vpack.c.b16 %v897, %v893
    %v1098 = vpack.c.b16 %v898, %v894
    %v1099 = vpack.c.b16 %v903, %v899
    %v1100 = vpack.c.b16 %v904, %v900
    %v1101 = vpack.c.b16 %v905, %v901
    %v1102 = vpack.c.b16 %v906, %v902
    %vm1299 = vcmask 130048
    %v1301 = vsel %vm1299, %v312, 0
    %1303 = vmatprep.subr.bf16.mxu0 %v936
    %1304 = vmatpush1.bf16.msra.mxu0 %v935
    %1305 = vmatprep.subr.bf16.mxu0 %v932
    %1306 = vmatpush1.bf16.msra.mxu0 %v931
    %1307 = vmatprep.subr.bf16.mxu0 %v928
    %1308 = vmatpush1.bf16.msra.mxu0 %v927
    %1309 = vmatprep.subr.bf16.mxu0 %v924
    %1310 = vmatpush1.bf16.msra.mxu0 %v923
    %1311 = vmatprep.subr.bf16.mxu0 %v920
    %1312 = vmatpush1.bf16.msra.mxu0 %v919
    %1313 = vmatprep.subr.bf16.mxu0 %v916
    %1314 = vmatpush1.bf16.msra.mxu0 %v915
    %1315 = vmatprep.subr.bf16.mxu0 %v912
    %1316 = vmatpush1.bf16.msra.mxu0 %v911
    %1317 = vmatprep.subr.bf16.mxu0 %v908
    %1318 = vmatpush1.bf16.msra.mxu0 %v907
    %1319 = vmatprep.subr.bf16.mxu0 %v968
    %1320 = vmatpush2.bf16.msra.mxu0 %v967
    %1321 = vmatprep.subr.bf16.mxu0 %v964
    %1322 = vmatpush2.bf16.msra.mxu0 %v963
    %1323 = vmatprep.subr.bf16.mxu0 %v960
    %1324 = vmatpush2.bf16.msra.mxu0 %v959
    %1325 = vmatprep.subr.bf16.mxu0 %v956
    %1326 = vmatpush2.bf16.msra.mxu0 %v955
    %1327 = vmatprep.subr.bf16.mxu0 %v952
    %1328 = vmatpush2.bf16.msra.mxu0 %v951
    %1329 = vmatprep.subr.bf16.mxu0 %v948
    %1330 = vmatpush2.bf16.msra.mxu0 %v947
    %1331 = vmatprep.subr.bf16.mxu0 %v944
    %1332 = vmatpush2.bf16.msra.mxu0 %v943
    %1333 = vmatprep.subr.bf16.mxu0 %v940
    %1334 = vmatpush2.bf16.msra.mxu0 %v939
    %1335 = vmatprep.mubr.bf16.mxu0 %v307
    %1336 = vmatmul.mubr.bf16.gmra.mxu0 %v306
    %v1337 = vpop.f32.mrf.mxu0
    %v1338 = vadd.f32 %v278, %v1337
    %v1339 = vpop.f32.mrf.mxu0
    %v1340 = vadd.f32 %v282, %v1339
    %v1341 = vpop.f32.mrf.mxu0
    %v1342 = vpop.f32.mrf.mxu0
    %1343 = vdwg.mxu0
    %1344 = vmatprep.subr.bf16.mxu0 %v1000
    %1345 = vmatpush1.bf16.msra.mxu0 %v999
    %1346 = vmatprep.subr.bf16.mxu0 %v996
    %1347 = vmatpush1.bf16.msra.mxu0 %v995
    %1348 = vmatprep.subr.bf16.mxu0 %v992
    %1349 = vmatpush1.bf16.msra.mxu0 %v991
    %1350 = vmatprep.subr.bf16.mxu0 %v988
    %1351 = vmatpush1.bf16.msra.mxu0 %v987
    %1352 = vmatprep.subr.bf16.mxu0 %v984
    %1353 = vmatpush1.bf16.msra.mxu0 %v983
    %1354 = vmatprep.subr.bf16.mxu0 %v980
    %1355 = vmatpush1.bf16.msra.mxu0 %v979
    %1356 = vmatprep.subr.bf16.mxu0 %v976
    %1357 = vmatpush1.bf16.msra.mxu0 %v975
    %1358 = vmatprep.subr.bf16.mxu0 %v972
    %1359 = vmatpush1.bf16.msra.mxu0 %v971
    %1360 = vmatprep.subr.bf16.mxu0 %v1032
    %1361 = vmatpush2.bf16.msra.mxu0 %v1031
    %1362 = vmatprep.subr.bf16.mxu0 %v1028
    %1363 = vmatpush2.bf16.msra.mxu0 %v1027
    %1364 = vmatprep.subr.bf16.mxu0 %v1024
    %1365 = vmatpush2.bf16.msra.mxu0 %v1023
    %1366 = vmatprep.subr.bf16.mxu0 %v1020
    %1367 = vmatpush2.bf16.msra.mxu0 %v1019
    %1368 = vmatprep.subr.bf16.mxu0 %v1016
    %1369 = vmatpush2.bf16.msra.mxu0 %v1015
    %1370 = vmatprep.subr.bf16.mxu0 %v1012
    %1371 = vmatpush2.bf16.msra.mxu0 %v1011
    %1372 = vmatprep.subr.bf16.mxu0 %v1008
    %1373 = vmatpush2.bf16.msra.mxu0 %v1007
    %1374 = vmatprep.subr.bf16.mxu0 %v1004
    %1375 = vmatpush2.bf16.msra.mxu0 %v1003
    %1376 = vmatprep.mubr.bf16.mxu0 %v309
    %1377 = vmatmul.mubr.bf16.gmra.mxu0 %v308
    %v1378 = vpop.f32.mrf.mxu0
    %v1379 = vadd.f32 %v1338, %v1378
    %v1380 = vpop.f32.mrf.mxu0
    %v1381 = vadd.f32 %v1340, %v1380
    %v1382 = vpop.f32.mrf.mxu0
    %v1383 = vpop.f32.mrf.mxu0
    %1384 = vdwg.mxu0
    %1385 = vmatprep.subr.bf16.mxu0 %v1064
    %1386 = vmatpush1.bf16.msra.mxu0 %v1063
    %1387 = vmatprep.subr.bf16.mxu0 %v1060
    %1388 = vmatpush1.bf16.msra.mxu0 %v1059
    %1389 = vmatprep.subr.bf16.mxu0 %v1056
    %1390 = vmatpush1.bf16.msra.mxu0 %v1055
    %1391 = vmatprep.subr.bf16.mxu0 %v1052
    %1392 = vmatpush1.bf16.msra.mxu0 %v1051
    %1393 = vmatprep.subr.bf16.mxu0 %v1048
    %1394 = vmatpush1.bf16.msra.mxu0 %v1047
    %1395 = vmatprep.subr.bf16.mxu0 %v1044
    %1396 = vmatpush1.bf16.msra.mxu0 %v1043
    %1397 = vmatprep.subr.bf16.mxu0 %v1040
    %1398 = vmatpush1.bf16.msra.mxu0 %v1039
    %1399 = vmatprep.subr.bf16.mxu0 %v1036
    %1400 = vmatpush1.bf16.msra.mxu0 %v1035
    %1401 = vmatprep.subr.bf16.mxu0 %v1096
    %1402 = vmatpush2.bf16.msra.mxu0 %v1095
    %1403 = vmatprep.subr.bf16.mxu0 %v1092
    %1404 = vmatpush2.bf16.msra.mxu0 %v1091
    %1405 = vmatprep.subr.bf16.mxu0 %v1088
    %1406 = vmatpush2.bf16.msra.mxu0 %v1087
    %1407 = vmatprep.subr.bf16.mxu0 %v1084
    %1408 = vmatpush2.bf16.msra.mxu0 %v1083
    %1409 = vmatprep.subr.bf16.mxu0 %v1080
    %1410 = vmatpush2.bf16.msra.mxu0 %v1079
    %1411 = vmatprep.subr.bf16.mxu0 %v1076
    %1412 = vmatpush2.bf16.msra.mxu0 %v1075
    %1413 = vmatprep.subr.bf16.mxu0 %v1072
    %1414 = vmatpush2.bf16.msra.mxu0 %v1071
    %1415 = vmatprep.subr.bf16.mxu0 %v1068
    %1416 = vmatpush2.bf16.msra.mxu0 %v1067
    %1417 = vmatprep.mubr.bf16.mxu0 %v311
    %1418 = vmatmul.mubr.bf16.gmra.mxu0 %v310
    %v1419 = vpop.f32.mrf.mxu0
    %v1420 = vadd.f32 %v1379, %v1419
    %v1421 = vpop.f32.mrf.mxu0
    %v1422 = vadd.f32 %v1381, %v1421
    %v1423 = vpop.f32.mrf.mxu0
    %v1424 = vpop.f32.mrf.mxu0
    %1425 = vdwg.mxu0
    %1426 = vmatprep.subr.bf16.mxu0 0
    %1427 = vmatpush1.bf16.msra.mxu0 0
    %1428 = vmatprep.subr.bf16.mxu0 0
    %1429 = vmatpush1.bf16.msra.mxu0 0
    %1430 = vmatprep.subr.bf16.mxu0 0
    %1431 = vmatpush1.bf16.msra.mxu0 0
    %1432 = vmatprep.subr.bf16.mxu0 0
    %1433 = vmatpush1.bf16.msra.mxu0 0
    %1434 = vmatprep.subr.bf16.mxu0 0
    %1435 = vmatpush1.bf16.msra.mxu0 0
    %1436 = vmatprep.subr.bf16.mxu0 0
    %1437 = vmatpush1.bf16.msra.mxu0 0
    %1438 = vmatprep.subr.bf16.mxu0 0
    %1439 = vmatpush1.bf16.msra.mxu0 0
    %1440 = vmatprep.subr.bf16.mxu0 %v1100
    %1441 = vmatpush1.bf16.msra.mxu0 %v1099
    %1442 = vmatprep.subr.bf16.mxu0 0
    %1443 = vmatpush2.bf16.msra.mxu0 0
    %1444 = vmatprep.subr.bf16.mxu0 0
    %1445 = vmatpush2.bf16.msra.mxu0 0
    %1446 = vmatprep.subr.bf16.mxu0 0
    %1447 = vmatpush2.bf16.msra.mxu0 0
    %1448 = vmatprep.subr.bf16.mxu0 0
    %1449 = vmatpush2.bf16.msra.mxu0 0
    %1450 = vmatprep.subr.bf16.mxu0 0
    %1451 = vmatpush2.bf16.msra.mxu0 0
    %1452 = vmatprep.subr.bf16.mxu0 0
    %1453 = vmatpush2.bf16.msra.mxu0 0
    %1454 = vmatprep.subr.bf16.mxu0 0
    %1455 = vmatpush2.bf16.msra.mxu0 0
    %1456 = vmatprep.subr.bf16.mxu0 0
    %1457 = vmatpush2.bf16.msra.mxu0 0
    %1458 = vmatprep.mubr.bf16.mxu0 0
    %1459 = vmatmul.mubr.bf16.gmra.mxu0 %v1301
    %v1460 = vpop.f32.mrf.mxu0
    %v1461 = vadd.f32 %v1420, %v1460
    %v1462 = vpop.f32.mrf.mxu0
    %v1463 = vadd.f32 %v1422, %v1462
    %v1464 = vpop.f32.mrf.mxu0
    %v1465 = vpop.f32.mrf.mxu0
    %1466 = vdwg.mxu0
    %1467 = vmatprep.subr.bf16.mxu0 %v938
    %1468 = vmatpush1.bf16.msra.mxu0 %v937
    %1469 = vmatprep.subr.bf16.mxu0 %v934
    %1470 = vmatpush1.bf16.msra.mxu0 %v933
    %1471 = vmatprep.subr.bf16.mxu0 %v930
    %1472 = vmatpush1.bf16.msra.mxu0 %v929
    %1473 = vmatprep.subr.bf16.mxu0 %v926
    %1474 = vmatpush1.bf16.msra.mxu0 %v925
    %1475 = vmatprep.subr.bf16.mxu0 %v922
    %1476 = vmatpush1.bf16.msra.mxu0 %v921
    %1477 = vmatprep.subr.bf16.mxu0 %v918
    %1478 = vmatpush1.bf16.msra.mxu0 %v917
    %1479 = vmatprep.subr.bf16.mxu0 %v914
    %1480 = vmatpush1.bf16.msra.mxu0 %v913
    %1481 = vmatprep.subr.bf16.mxu0 %v910
    %1482 = vmatpush1.bf16.msra.mxu0 %v909
    %1483 = vmatprep.subr.bf16.mxu0 %v970
    %1484 = vmatpush2.bf16.msra.mxu0 %v969
    %1485 = vmatprep.subr.bf16.mxu0 %v966
    %1486 = vmatpush2.bf16.msra.mxu0 %v965
    %1487 = vmatprep.subr.bf16.mxu0 %v962
    %1488 = vmatpush2.bf16.msra.mxu0 %v961
    %1489 = vmatprep.subr.bf16.mxu0 %v958
    %1490 = vmatpush2.bf16.msra.mxu0 %v957
    %1491 = vmatprep.subr.bf16.mxu0 %v954
    %1492 = vmatpush2.bf16.msra.mxu0 %v953
    %1493 = vmatprep.subr.bf16.mxu0 %v950
    %1494 = vmatpush2.bf16.msra.mxu0 %v949
    %1495 = vmatprep.subr.bf16.mxu0 %v946
    %1496 = vmatpush2.bf16.msra.mxu0 %v945
    %1497 = vmatprep.subr.bf16.mxu0 %v942
    %1498 = vmatpush2.bf16.msra.mxu0 %v941
    %1499 = vmatprep.mubr.bf16.mxu0 %v307
    %1500 = vmatmul.mubr.bf16.gmra.mxu0 %v306
    %v1501 = vpop.f32.mrf.mxu0
    %v1502 = vadd.f32 %v286, %v1501
    %v1503 = vpop.f32.mrf.mxu0
    %v1504 = vadd.f32 %v290, %v1503
    %v1505 = vpop.f32.mrf.mxu0
    %v1506 = vpop.f32.mrf.mxu0
    %1507 = vdwg.mxu0
    %1508 = vmatprep.subr.bf16.mxu0 %v1002
    %1509 = vmatpush1.bf16.msra.mxu0 %v1001
    %1510 = vmatprep.subr.bf16.mxu0 %v998
    %1511 = vmatpush1.bf16.msra.mxu0 %v997
    %1512 = vmatprep.subr.bf16.mxu0 %v994
    %1513 = vmatpush1.bf16.msra.mxu0 %v993
    %1514 = vmatprep.subr.bf16.mxu0 %v990
    %1515 = vmatpush1.bf16.msra.mxu0 %v989
    %1516 = vmatprep.subr.bf16.mxu0 %v986
    %1517 = vmatpush1.bf16.msra.mxu0 %v985
    %1518 = vmatprep.subr.bf16.mxu0 %v982
    %1519 = vmatpush1.bf16.msra.mxu0 %v981
    %1520 = vmatprep.subr.bf16.mxu0 %v978
    %1521 = vmatpush1.bf16.msra.mxu0 %v977
    %1522 = vmatprep.subr.bf16.mxu0 %v974
    %1523 = vmatpush1.bf16.msra.mxu0 %v973
    %1524 = vmatprep.subr.bf16.mxu0 %v1034
    %1525 = vmatpush2.bf16.msra.mxu0 %v1033
    %1526 = vmatprep.subr.bf16.mxu0 %v1030
    %1527 = vmatpush2.bf16.msra.mxu0 %v1029
    %1528 = vmatprep.subr.bf16.mxu0 %v1026
    %1529 = vmatpush2.bf16.msra.mxu0 %v1025
    %1530 = vmatprep.subr.bf16.mxu0 %v1022
    %1531 = vmatpush2.bf16.msra.mxu0 %v1021
    %1532 = vmatprep.subr.bf16.mxu0 %v1018
    %1533 = vmatpush2.bf16.msra.mxu0 %v1017
    %1534 = vmatprep.subr.bf16.mxu0 %v1014
    %1535 = vmatpush2.bf16.msra.mxu0 %v1013
    %1536 = vmatprep.subr.bf16.mxu0 %v1010
    %1537 = vmatpush2.bf16.msra.mxu0 %v1009
    %1538 = vmatprep.subr.bf16.mxu0 %v1006
    %1539 = vmatpush2.bf16.msra.mxu0 %v1005
    %1540 = vmatprep.mubr.bf16.mxu0 %v309
    %1541 = vmatmul.mubr.bf16.gmra.mxu0 %v308
    %v1542 = vpop.f32.mrf.mxu0
    %v1543 = vadd.f32 %v1502, %v1542
    %v1544 = vpop.f32.mrf.mxu0
    %v1545 = vadd.f32 %v1504, %v1544
    %v1546 = vpop.f32.mrf.mxu0
    %v1547 = vpop.f32.mrf.mxu0
    %1548 = vdwg.mxu0
    %1549 = vmatprep.subr.bf16.mxu0 %v1066
    %1550 = vmatpush1.bf16.msra.mxu0 %v1065
    %1551 = vmatprep.subr.bf16.mxu0 %v1062
    %1552 = vmatpush1.bf16.msra.mxu0 %v1061
    %1553 = vmatprep.subr.bf16.mxu0 %v1058
    %1554 = vmatpush1.bf16.msra.mxu0 %v1057
    %1555 = vmatprep.subr.bf16.mxu0 %v1054
    %1556 = vmatpush1.bf16.msra.mxu0 %v1053
    %1557 = vmatprep.subr.bf16.mxu0 %v1050
    %1558 = vmatpush1.bf16.msra.mxu0 %v1049
    %1559 = vmatprep.subr.bf16.mxu0 %v1046
    %1560 = vmatpush1.bf16.msra.mxu0 %v1045
    %1561 = vmatprep.subr.bf16.mxu0 %v1042
    %1562 = vmatpush1.bf16.msra.mxu0 %v1041
    %1563 = vmatprep.subr.bf16.mxu0 %v1038
    %1564 = vmatpush1.bf16.msra.mxu0 %v1037
    %1565 = vmatprep.subr.bf16.mxu0 %v1098
    %1566 = vmatpush2.bf16.msra.mxu0 %v1097
    %1567 = vmatprep.subr.bf16.mxu0 %v1094
    %1568 = vmatpush2.bf16.msra.mxu0 %v1093
    %1569 = vmatprep.subr.bf16.mxu0 %v1090
    %1570 = vmatpush2.bf16.msra.mxu0 %v1089
    %1571 = vmatprep.subr.bf16.mxu0 %v1086
    %1572 = vmatpush2.bf16.msra.mxu0 %v1085
    %1573 = vmatprep.subr.bf16.mxu0 %v1082
    %1574 = vmatpush2.bf16.msra.mxu0 %v1081
    %1575 = vmatprep.subr.bf16.mxu0 %v1078
    %1576 = vmatpush2.bf16.msra.mxu0 %v1077
    %1577 = vmatprep.subr.bf16.mxu0 %v1074
    %1578 = vmatpush2.bf16.msra.mxu0 %v1073
    %1579 = vmatprep.subr.bf16.mxu0 %v1070
    %1580 = vmatpush2.bf16.msra.mxu0 %v1069
    %1581 = vmatprep.mubr.bf16.mxu0 %v311
    %1582 = vmatmul.mubr.bf16.gmra.mxu0 %v310
    %v1583 = vpop.f32.mrf.mxu0
    %v1584 = vadd.f32 %v1543, %v1583
    %v1585 = vpop.f32.mrf.mxu0
    %v1586 = vadd.f32 %v1545, %v1585
    %v1587 = vpop.f32.mrf.mxu0
    %v1588 = vpop.f32.mrf.mxu0
    %1589 = vdwg.mxu0
    %1590 = vmatprep.subr.bf16.mxu0 0
    %1591 = vmatpush1.bf16.msra.mxu0 0
    %1592 = vmatprep.subr.bf16.mxu0 0
    %1593 = vmatpush1.bf16.msra.mxu0 0
    %1594 = vmatprep.subr.bf16.mxu0 0
    %1595 = vmatpush1.bf16.msra.mxu0 0
    %1596 = vmatprep.subr.bf16.mxu0 0
    %1597 = vmatpush1.bf16.msra.mxu0 0
    %1598 = vmatprep.subr.bf16.mxu0 0
    %1599 = vmatpush1.bf16.msra.mxu0 0
    %1600 = vmatprep.subr.bf16.mxu0 0
    %1601 = vmatpush1.bf16.msra.mxu0 0
    %1602 = vmatprep.subr.bf16.mxu0 0
    %1603 = vmatpush1.bf16.msra.mxu0 0
    %1604 = vmatprep.subr.bf16.mxu0 %v1102
    %1605 = vmatpush1.bf16.msra.mxu0 %v1101
    %1606 = vmatprep.subr.bf16.mxu0 0
    %1607 = vmatpush2.bf16.msra.mxu0 0
    %1608 = vmatprep.subr.bf16.mxu0 0
    %1609 = vmatpush2.bf16.msra.mxu0 0
    %1610 = vmatprep.subr.bf16.mxu0 0
    %1611 = vmatpush2.bf16.msra.mxu0 0
    %1612 = vmatprep.subr.bf16.mxu0 0
    %1613 = vmatpush2.bf16.msra.mxu0 0
    %1614 = vmatprep.subr.bf16.mxu0 0
    %1615 = vmatpush2.bf16.msra.mxu0 0
    %1616 = vmatprep.subr.bf16.mxu0 0
    %1617 = vmatpush2.bf16.msra.mxu0 0
    %1618 = vmatprep.subr.bf16.mxu0 0
    %1619 = vmatpush2.bf16.msra.mxu0 0
    %1620 = vmatprep.subr.bf16.mxu0 0
    %1621 = vmatpush2.bf16.msra.mxu0 0
    %1622 = vmatprep.mubr.bf16.mxu0 0
    %1623 = vmatmul.mubr.bf16.gmra.mxu0 %v1301
    %v1624 = vpop.f32.mrf.mxu0
    %v1625 = vadd.f32 %v1584, %v1624
    %v1626 = vpop.f32.mrf.mxu0
    %v1627 = vadd.f32 %v1586, %v1626
    %v1628 = vpop.f32.mrf.mxu0
    %v1629 = vpop.f32.mrf.mxu0
    %1630 = vdwg.mxu0
    %v1631 = vmax.f32 %v1461, 0.0
    %v1632 = vmax.f32 %v1463, 0.0
    %v1633 = vmax.f32 %v1625, 0.0
    %v1634 = vmax.f32 %v1627, 0.0
    %v1635 = vld [vmem:[#allocation8] sm:$0xff]
    %v1636 = vld [vmem:[#allocation8 + $0x8] sm:$0xff]
    %v1637 = vld [vmem:[#allocation8 + $0x10] sm:$0xff]
    %v1638 = vld [vmem:[#allocation8 + $0x18] sm:$0xff]
    %v1639 = vld [vmem:[#allocation8 + $0x20] sm:$0xff]
    %v1640 = vld [vmem:[#allocation8 + $0x28] sm:$0xff]
    %v1641 = vld [vmem:[#allocation8 + $0x30] sm:$0xff]
    %v1642 = vld [vmem:[#allocation8 + $0x38] sm:$0xff]
    %v1643 = vld [vmem:[#allocation8 + $0x40] sm:$0xff]
    %v1644 = vld [vmem:[#allocation8 + $0x48] sm:$0xff]
    %v1645 = vld [vmem:[#allocation8 + $0x50] sm:$0xff]
    %v1646 = vld [vmem:[#allocation8 + $0x58] sm:$0xff]
    %v1647 = vld [vmem:[#allocation8 + $0x60] sm:$0xff]
    %v1648 = vld [vmem:[#allocation8 + $0x68] sm:$0xff]
    %v1649 = vld [vmem:[#allocation8 + $0x70] sm:$0xff]
    %v1650 = vld [vmem:[#allocation8 + $0x78] sm:$0xff]
    %v1651 = vld [vmem:[#allocation8 + $0x80] sm:$0xff]
    %v1652 = vld [vmem:[#allocation8 + $0x88] sm:$0xff]
    %v1653 = vld [vmem:[#allocation8 + $0x90] sm:$0xff]
    %v1654 = vld [vmem:[#allocation8 + $0x98] sm:$0xff]
    %v1655 = vld [vmem:[#allocation8 + $0xa0] sm:$0xff]
    %v1656 = vld [vmem:[#allocation8 + $0xa8] sm:$0xff]
    %v1657 = vld [vmem:[#allocation8 + $0xb0] sm:$0xff]
    %v1658 = vld [vmem:[#allocation8 + $0xb8] sm:$0xff]
    %v1659 = vld [vmem:[#allocation8 + $0xc0] sm:$0xff]
    %v1660 = vld [vmem:[#allocation8 + $0xc8] sm:$0xff]
    %v1661 = vld [vmem:[#allocation8 + $0xd0] sm:$0xff]
    %v1662 = vld [vmem:[#allocation8 + $0xd8] sm:$0xff]
    %v1663 = vld [vmem:[#allocation8 + $0xe0] sm:$0xff]
    %v1664 = vld [vmem:[#allocation8 + $0xe8] sm:$0xff]
    %v1665 = vld [vmem:[#allocation8 + $0xf0] sm:$0xff]
    %v1666 = vld [vmem:[#allocation8 + $0xf8] sm:$0xff]
    %v1667 = vld [vmem:[#allocation8 + $0x100] sm:$0xff]
    %v1668 = vld [vmem:[#allocation8 + $0x108] sm:$0xff]
    %v1669 = vld [vmem:[#allocation8 + $0x110] sm:$0xff]
    %v1670 = vld [vmem:[#allocation8 + $0x118] sm:$0xff]
    %v1671 = vld [vmem:[#allocation8 + $0x120] sm:$0xff]
    %v1672 = vld [vmem:[#allocation8 + $0x128] sm:$0xff]
    %v1673 = vld [vmem:[#allocation8 + $0x130] sm:$0xff]
    %v1674 = vld [vmem:[#allocation8 + $0x138] sm:$0xff]
    %v1675 = vld [vmem:[#allocation8 + $0x140] sm:$0xff]
    %v1676 = vld [vmem:[#allocation8 + $0x148] sm:$0xff]
    %v1677 = vld [vmem:[#allocation8 + $0x150] sm:$0xff]
    %v1678 = vld [vmem:[#allocation8 + $0x158] sm:$0xff]
    %v1679 = vld [vmem:[#allocation8 + $0x160] sm:$0xff]
    %v1680 = vld [vmem:[#allocation8 + $0x168] sm:$0xff]
    %v1681 = vld [vmem:[#allocation8 + $0x170] sm:$0xff]
    %v1682 = vld [vmem:[#allocation8 + $0x178] sm:$0xff]
    %v1683 = vld [vmem:[#allocation8 + $0x180] sm:$0xff]
    %v1684 = vld [vmem:[#allocation8 + $0x188] sm:$0xff]
    %v1685 = vld [vmem:[#allocation8 + $0x190] sm:$0xff]
    %v1686 = vld [vmem:[#allocation8 + $0x198] sm:$0xff]
    %v1687 = vld [vmem:[#allocation8 + $0x1a0] sm:$0xff]
    %v1688 = vld [vmem:[#allocation8 + $0x1a8] sm:$0xff]
    %v1689 = vld [vmem:[#allocation8 + $0x1b0] sm:$0xff]
    %v1690 = vld [vmem:[#allocation8 + $0x1b8] sm:$0xff]
    %v1691 = vld [vmem:[#allocation8 + $0x1c0] sm:$0xff]
    %v1692 = vld [vmem:[#allocation8 + $0x1c8] sm:$0xff]
    %v1693 = vld [vmem:[#allocation8 + $0x1d0] sm:$0xff]
    %v1694 = vld [vmem:[#allocation8 + $0x1d8] sm:$0xff]
    %v1695 = vld [vmem:[#allocation8 + $0x1e0] sm:$0xff]
    %v1696 = vld [vmem:[#allocation8 + $0x1e8] sm:$0xff]
    %v1697 = vld [vmem:[#allocation8 + $0x1f0] sm:$0xff]
    %v1698 = vld [vmem:[#allocation8 + $0x1f8] sm:$0xff]
    %v1699 = vld [vmem:[%s4] sm:$0x1]
    %v1701 = vlaneseq
    %v1702 = vshrl.u32 %v1701, 7
    %v1703 = vsub.s32 0, %v1702
    %v1704 = vrot.slane %v1699, %v1703
    %1706 = vmatprep.subr.mxu0 0.0
    %1707 = vmatpush1.msra.mxu0 %v1650
    %1708 = vmatprep.subr.mxu0 0.0
    %1709 = vmatpush1.msra.mxu0 %v1649
    %1710 = vmatprep.subr.mxu0 0.0
    %1711 = vmatpush1.msra.mxu0 %v1648
    %1712 = vmatprep.subr.mxu0 0.0
    %1713 = vmatpush1.msra.mxu0 %v1647
    %1714 = vmatprep.subr.mxu0 0.0
    %1715 = vmatpush1.msra.mxu0 %v1646
    %1716 = vmatprep.subr.mxu0 0.0
    %1717 = vmatpush1.msra.mxu0 %v1645
    %1718 = vmatprep.subr.mxu0 0.0
    %1719 = vmatpush1.msra.mxu0 %v1644
    %1720 = vmatprep.subr.mxu0 0.0
    %1721 = vmatpush1.msra.mxu0 %v1643
    %1722 = vmatprep.subr.mxu0 0.0
    %1723 = vmatpush1.msra.mxu0 %v1642
    %1724 = vmatprep.subr.mxu0 0.0
    %1725 = vmatpush1.msra.mxu0 %v1641
    %1726 = vmatprep.subr.mxu0 0.0
    %1727 = vmatpush1.msra.mxu0 %v1640
    %1728 = vmatprep.subr.mxu0 0.0
    %1729 = vmatpush1.msra.mxu0 %v1639
    %1730 = vmatprep.subr.mxu0 0.0
    %1731 = vmatpush1.msra.mxu0 %v1638
    %1732 = vmatprep.subr.mxu0 0.0
    %1733 = vmatpush1.msra.mxu0 %v1637
    %1734 = vmatprep.subr.mxu0 0.0
    %1735 = vmatpush1.msra.mxu0 %v1636
    %1736 = vmatprep.subr.mxu0 0.0
    %1737 = vmatpush1.msra.mxu0 %v1635
    %1738 = vmatprep.subr.mxu0 0.0
    %1739 = vmatpush2.msra.mxu0 %v1666
    %1740 = vmatprep.subr.mxu0 0.0
    %1741 = vmatpush2.msra.mxu0 %v1665
    %1742 = vmatprep.subr.mxu0 0.0
    %1743 = vmatpush2.msra.mxu0 %v1664
    %1744 = vmatprep.subr.mxu0 0.0
    %1745 = vmatpush2.msra.mxu0 %v1663
    %1746 = vmatprep.subr.mxu0 0.0
    %1747 = vmatpush2.msra.mxu0 %v1662
    %1748 = vmatprep.subr.mxu0 0.0
    %1749 = vmatpush2.msra.mxu0 %v1661
    %1750 = vmatprep.subr.mxu0 0.0
    %1751 = vmatpush2.msra.mxu0 %v1660
    %1752 = vmatprep.subr.mxu0 0.0
    %1753 = vmatpush2.msra.mxu0 %v1659
    %1754 = vmatprep.subr.mxu0 0.0
    %1755 = vmatpush2.msra.mxu0 %v1658
    %1756 = vmatprep.subr.mxu0 0.0
    %1757 = vmatpush2.msra.mxu0 %v1657
    %1758 = vmatprep.subr.mxu0 0.0
    %1759 = vmatpush2.msra.mxu0 %v1656
    %1760 = vmatprep.subr.mxu0 0.0
    %1761 = vmatpush2.msra.mxu0 %v1655
    %1762 = vmatprep.subr.mxu0 0.0
    %1763 = vmatpush2.msra.mxu0 %v1654
    %1764 = vmatprep.subr.mxu0 0.0
    %1765 = vmatpush2.msra.mxu0 %v1653
    %1766 = vmatprep.subr.mxu0 0.0
    %1767 = vmatpush2.msra.mxu0 %v1652
    %1768 = vmatprep.subr.mxu0 0.0
    %1769 = vmatpush2.msra.mxu0 %v1651
    %1770 = vmatprep.mubr.f32.mxu0 %v1632
    %1771 = vmatmul.mubr.f32.gmra.mxu0 %v1631
    %v1772 = vpop.f32.mrf.mxu0
    %v1773 = vadd.f32 %v1704, %v1772
    %v1774 = vpop.f32.mrf.mxu0
    %1775 = vdwg.mxu0
    %1776 = vmatprep.subr.mxu0 0.0
    %1777 = vmatpush1.msra.mxu0 %v1682
    %1778 = vmatprep.subr.mxu0 0.0
    %1779 = vmatpush1.msra.mxu0 %v1681
    %1780 = vmatprep.subr.mxu0 0.0
    %1781 = vmatpush1.msra.mxu0 %v1680
    %1782 = vmatprep.subr.mxu0 0.0
    %1783 = vmatpush1.msra.mxu0 %v1679
    %1784 = vmatprep.subr.mxu0 0.0
    %1785 = vmatpush1.msra.mxu0 %v1678
    %1786 = vmatprep.subr.mxu0 0.0
    %1787 = vmatpush1.msra.mxu0 %v1677
    %1788 = vmatprep.subr.mxu0 0.0
    %1789 = vmatpush1.msra.mxu0 %v1676
    %1790 = vmatprep.subr.mxu0 0.0
    %1791 = vmatpush1.msra.mxu0 %v1675
    %1792 = vmatprep.subr.mxu0 0.0
    %1793 = vmatpush1.msra.mxu0 %v1674
    %1794 = vmatprep.subr.mxu0 0.0
    %1795 = vmatpush1.msra.mxu0 %v1673
    %1796 = vmatprep.subr.mxu0 0.0
    %1797 = vmatpush1.msra.mxu0 %v1672
    %1798 = vmatprep.subr.mxu0 0.0
    %1799 = vmatpush1.msra.mxu0 %v1671
    %1800 = vmatprep.subr.mxu0 0.0
    %1801 = vmatpush1.msra.mxu0 %v1670
    %1802 = vmatprep.subr.mxu0 0.0
    %1803 = vmatpush1.msra.mxu0 %v1669
    %1804 = vmatprep.subr.mxu0 0.0
    %1805 = vmatpush1.msra.mxu0 %v1668
    %1806 = vmatprep.subr.mxu0 0.0
    %1807 = vmatpush1.msra.mxu0 %v1667
    %1808 = vmatprep.subr.mxu0 0.0
    %1809 = vmatpush2.msra.mxu0 %v1698
    %1810 = vmatprep.subr.mxu0 0.0
    %1811 = vmatpush2.msra.mxu0 %v1697
    %1812 = vmatprep.subr.mxu0 0.0
    %1813 = vmatpush2.msra.mxu0 %v1696
    %1814 = vmatprep.subr.mxu0 0.0
    %1815 = vmatpush2.msra.mxu0 %v1695
    %1816 = vmatprep.subr.mxu0 0.0
    %1817 = vmatpush2.msra.mxu0 %v1694
    %1818 = vmatprep.subr.mxu0 0.0
    %1819 = vmatpush2.msra.mxu0 %v1693
    %1820 = vmatprep.subr.mxu0 0.0
    %1821 = vmatpush2.msra.mxu0 %v1692
    %1822 = vmatprep.subr.mxu0 0.0
    %1823 = vmatpush2.msra.mxu0 %v1691
    %1824 = vmatprep.subr.mxu0 0.0
    %1825 = vmatpush2.msra.mxu0 %v1690
    %1826 = vmatprep.subr.mxu0 0.0
    %1827 = vmatpush2.msra.mxu0 %v1689
    %1828 = vmatprep.subr.mxu0 0.0
    %1829 = vmatpush2.msra.mxu0 %v1688
    %1830 = vmatprep.subr.mxu0 0.0
    %1831 = vmatpush2.msra.mxu0 %v1687
    %1832 = vmatprep.subr.mxu0 0.0
    %1833 = vmatpush2.msra.mxu0 %v1686
    %1834 = vmatprep.subr.mxu0 0.0
    %1835 = vmatpush2.msra.mxu0 %v1685
    %1836 = vmatprep.subr.mxu0 0.0
    %1837 = vmatpush2.msra.mxu0 %v1684
    %1838 = vmatprep.subr.mxu0 0.0
    %1839 = vmatpush2.msra.mxu0 %v1683
    %1840 = vmatprep.mubr.f32.mxu0 %v1634
    %1841 = vmatmul.mubr.f32.gmra.mxu0 %v1633
    %v1842 = vpop.f32.mrf.mxu0
    %v1843 = vadd.f32 %v1773, %v1842
    %v1844 = vpop.f32.mrf.mxu0
    %1845 = vdwg.mxu0
    %1846 = vst [vmem:[#allocation10] sm:$0xff] %v1843
    // Predicated region
    $region38: #{tpu_custom_call.1} parent=1 // pred_check
      _
    $region39: #{tpu_custom_call.1} parent=1 // pred_check_branch
      %1848 = sbr.rel (0) target = $region41
    $region40: #{tpu_custom_call.1} parent=1 // pred_region
      %s1850 = ssub.s32 128, 128
      %1851 = vsyncadd [#allocation4], %s1850
      %s1853 = sshll.u32 [#allocation10], 4
      %s1854 = int_to_ptr.vmem [resolvable:$true] %s1853
      %1856 = dma.vmem_to_hbm [thread:$0]  %s1854, 128, %s5, [#allocation4]
    $region41: #{tpu_custom_call.1} parent=1 // pred_fallthru
      _
    // Predicated region
    $region42: #{tpu_custom_call.1} parent=1 // pred_check
      _
    $region43: #{tpu_custom_call.1} parent=1 // pred_check_branch
      %1858 = sbr.rel (0) target = $region45
    $region44: #{tpu_custom_call.1} parent=1 // pred_region
      %1859 = dma.done [#allocation4], 128
    $region45: #{tpu_custom_call.1} parent=1 // pred_fallthru
      _
    %1860 = vsyncpa [#allocation3], 1
    %1861 = vsyncpa [#allocation6], 1
    %1862 = vsyncpa [#allocation9], 1
    %1863 = vsyncpa [#allocation4], 1

</llo_original>
